<compile_context>
chip_gen: v5e
topology: v5e:2x2
jax: 0.10.0
libtpu: 0.0.40
codegen_flags: <defaults>
</compile_context>

<pallas_src>
import functools

import jax
import jax.numpy as jnp
import numpy as np
from jax import lax
from jax.experimental import pallas as pl
from jax.experimental.pallas import tpu as pltpu


# ----------------------------------------------------------------------------
# Pallas kernel: one grid step == TB batch elements.
# ----------------------------------------------------------------------------
def hypergraph_conv_kernel(hg_ref, nf_ref, w_ref, out_ref, *, unroll_edges):
    hg = hg_ref[...].astype(jnp.float32)     # (TB, N, E) incidence
    nf = nf_ref[...].astype(jnp.float32)     # (TB, N, F) node features
    w_abs = w_ref[...]                       # (1, E)     |W_line|, f32

    # Weighted node degree d[b,n] = sum_e H[b,n,e] |w_e|  ->  D^{-1/2}, 0-deg -> 0.
    d = jnp.sum(hg * w_abs[:, None, :], axis=-1)           # (TB, N)
    d_inv = lax.rsqrt(d)                                    # EUP slot
    d_inv = jnp.where(d_inv == jnp.inf, 0.0, d_inv)         # torch: D_inv[D_inv==inf]=0

    # Edge degree bdeg[b,e] = sum_n H[b,n,e]  ->  B^{-1}, 0-deg -> 0.
    bdeg = jnp.sum(hg, axis=1)                              # (TB, E)
    b_inv = 1.0 / bdeg                                      # exact division: 0 -> inf
    b_inv = jnp.where(b_inv == jnp.inf, 0.0, b_inv)         # torch: B_inv[B_inv==inf]=0

    # Diagonal matmuls collapse to row / column scalings (VPU only):
    hr = hg * d_inv[:, :, None]                             # D^{-1/2} H            (TB,N,E)
    m = hr * (w_abs * b_inv)[:, None, :]                    # D^{-1/2} H |W| B^{-1} (TB,N,E)

    # Reassociated contraction  x = m @ (hr^T @ nf)  -- never form the (TB,N,N) matrix.
    if unroll_edges:
        # Tiny edge dim: unroll over e; broadcast FMAs / sublane reductions on
        # full-lane (TB, N, F) slabs on the VPU; no underfilled per-batch MXU tiles.
        x = jnp.zeros(nf.shape, jnp.float32)
        for e in range(hg.shape[-1]):
            y_e = jnp.sum(hr[:, :, e:e + 1] * nf, axis=1, keepdims=True)   # (TB,1,F)
            x = x + m[:, :, e:e + 1] * y_e                                  # (TB,N,F)
    else:
        y = jnp.einsum("bne,bnf->bef", hr, nf, preferred_element_type=jnp.float32)
        x = jnp.einsum("bne,bef->bnf", m, y, preferred_element_type=jnp.float32)

    out_ref[...] = x.astype(out_ref.dtype)


# ----------------------------------------------------------------------------
# Generation-aware tiling helpers.
# ----------------------------------------------------------------------------
def _round_up(x, m):
    return ((x + m - 1) // m) * m


def _device_info():
    """Returns (vmem_budget_bytes, tensorcores_per_chip) for the local TPU."""
    vmem_budget, num_tc = 32 * 1024 * 1024, 1                # safe defaults
    try:
        kind = jax.devices()[0].device_kind.lower()
    except Exception:
        return vmem_budget, num_tc
    if "v7" in kind or "7x" in kind:                         # v7x: 64 MiB VMEM, 2 TCs
        return 40 * 1024 * 1024, 2
    if "v6" in kind or "trillium" in kind:                   # v6e: 128 MiB VMEM, 1 TC
        return 56 * 1024 * 1024, 1
    if "v5 lite" in kind or "v5e" in kind:                   # v5e: 128 MiB VMEM, 1 TC
        return 56 * 1024 * 1024, 1
    if "v5" in kind or "v4" in kind:                         # v5p / v4 megacore: 2 TCs
        return 56 * 1024 * 1024, 2
    return vmem_budget, num_tc


def _vmem_per_batch_elem(N, E, F, nf_bytes, out_bytes, unroll_edges):
    """Padded-aware VMEM footprint (bytes) of one batch element."""
    pN, pE, pF = _round_up(N, 8), _round_up(E, 128), _round_up(F, 128)
    hg_blk = pN * pE * 4
    nf_blk = pN * pF * nf_bytes
    out_blk = pN * pF * out_bytes
    # In-kernel f32 temporaries: hg/nf upcasts or hr+m, x accumulator (+ y for MXU path),
    # degree vectors (counted conservatively at full vreg footprint).
    tmp = 2 * pN * pE * 4 + 2 * pN * pF * 4
    if not unroll_edges:
        tmp += _round_up(E, 8) * pF * 4
    tmp += 2 * 8 * _round_up(N, 128) * 4 + 2 * 8 * pE * 4
    # Double-buffered pipelined I/O blocks:
    return 2 * (hg_blk + nf_blk + out_blk) + tmp


def _pick_block_batch(B, N, E, F, *, vmem_budget_bytes, num_tc,
                      nf_bytes, out_bytes, unroll_edges):
    per_elem = _vmem_per_batch_elem(N, E, F, nf_bytes, out_bytes, unroll_edges)
    cap = max(1, int(vmem_budget_bytes // max(per_elem, 1)))
    divisors = [d for d in range(1, B + 1) if B % d == 0]
    feasible = [d for d in divisors if d <= cap] or [1]
    if num_tc > 1 and B >= num_tc:
        # Multi-TC chips: keep the grid-step count a multiple of the core count
        # so dimension_semantics=("parallel",) splits the batch evenly.
        even = [d for d in feasible if (B // d) % num_tc == 0]
        if even:
            return max(even)
    # Single-TC chips: largest tile that fits -> fewest ~0.35 us grid steps,
    # biggest DMAs (also maximizes bytes of nf+out moved per step).
    return max(feasible)


# ----------------------------------------------------------------------------
# Wrapper: grid over batch tiles, weight vector resident as one tiny VMEM block.
# ----------------------------------------------------------------------------
def hypergraph_conv_forward(node_features, hyper_graph, w_line, *,
                            block_batch=None, feature_dtype=None):
    hyper_graph = hyper_graph.astype(jnp.float32)
    feat_dt = jnp.dtype(feature_dtype) if feature_dtype is not None else jnp.dtype(jnp.float32)
    node_features = node_features.astype(feat_dt)

    B, N, F = node_features.shape
    Bh, Nh, E = hyper_graph.shape
    assert (B, N) == (Bh, Nh), "node_features / hyper_graph batch or node dims mismatch"

    w_abs = jnp.abs(w_line).reshape(1, E).astype(jnp.float32)

    unroll_edges = E <= 16                     # tiny contraction dim -> VPU unroll
    vmem_budget, num_tc = _device_info()
    nf_bytes = node_features.dtype.itemsize
    out_bytes = feat_dt.itemsize

    tb = block_batch if block_batch is not None else _pick_block_batch(
        B, N, E, F, vmem_budget_bytes=vmem_budget, num_tc=num_tc,
        nf_bytes=nf_bytes, out_bytes=out_bytes, unroll_edges=unroll_edges)
    assert B % tb == 0, f"block_batch={tb} must divide batch={B}"
    grid = (B // tb,)

    kernel = functools.partial(hypergraph_conv_kernel, unroll_edges=unroll_edges)

    return pl.pallas_call(
        kernel,
        out_shape=jax.ShapeDtypeStruct((B, N, F), feat_dt),
        grid_spec=pltpu.PrefetchScalarGridSpec(
            num_scalar_prefetch=0,
            grid=grid,
            in_specs=[
                pl.BlockSpec((tb, N, E), lambda b: (b, 0, 0)),   # hyper_graph tile
                pl.BlockSpec((tb, N, F), lambda b: (b, 0, 0)),   # node_features tile
                pl.BlockSpec((1, E), lambda b: (0, 0)),          # |W_line| (grid-invariant)
            ],
            out_specs=pl.BlockSpec((tb, N, F), lambda b: (b, 0, 0)),
        ),
        compiler_params=pltpu.CompilerParams(
            dimension_semantics=("parallel",),
            vmem_limit_bytes=vmem_budget,      # same budget used for tile sizing
        ),
    )(hyper_graph, node_features, w_abs)


# ----------------------------------------------------------------------------
# Pure-JAX reference mirroring the PyTorch forward (explicit diag matrices).
# ----------------------------------------------------------------------------
def _diag_embed(v):
    return v[..., :, None] * jnp.eye(v.shape[-1], dtype=v.dtype)


def ref_forward(node_features, hyper_graph, w_line):
    W = jnp.diag(w_line)                                      # (E, E)
    B_inv = jnp.sum(hyper_graph, axis=-2)                     # (B, E)
    B_inv = _diag_embed(B_inv)                                # (B, E, E)
    softmax_w = jnp.abs(W)
    D_inv = jnp.sum(hyper_graph @ softmax_w, axis=-1)         # (B, N)
    D_inv = _diag_embed(D_inv)                                # (B, N, N)
    D_inv = D_inv ** (-0.5)
    B_inv = B_inv ** (-1.0)
    D_inv = jnp.where(D_inv == jnp.inf, 0.0, D_inv)
    B_inv = jnp.where(B_inv == jnp.inf, 0.0, B_inv)
    A = D_inv @ hyper_graph
    A = A @ jnp.abs(W)
    A = A @ B_inv
    A = A @ jnp.transpose(hyper_graph, (0, 2, 1))
    A = A @ D_inv
    return A @ node_features


if __name__ == "__main__":
    # Small demo shapes: batch=8, n_nodes=8, n_edges=8, feature dim=128 (lane-dense).
    B, N, E, F = 8, 8, 8, 128

    key = jax.random.PRNGKey(0)
    k_h, k_x, k_w = jax.random.split(key, 3)

    # 0/1 incidence matrix (possible empty rows / columns exercise the inf -> 0
    # degree masking), dense node features, signed edge weights.
    hyper_graph = (jax.random.uniform(k_h, (B, N, E)) < 0.5).astype(jnp.float32)
    node_features = jax.random.normal(k_x, (B, N, F), jnp.float32)
    signs = jnp.where(jnp.arange(E) % 2 == 0, 1.0, -1.0)
    w_line = (0.5 + jax.random.uniform(k_w, (E,), jnp.float32)) * signs

    out = hypergraph_conv_forward(node_features, hyper_graph, w_line)
    out = jax.block_until_ready(out)

    ref = ref_forward(node_features, hyper_graph, w_line)
    np.testing.assert_allclose(np.asarray(out), np.asarray(ref), rtol=1e-3, atol=1e-3)

    print("KERNEL_OK")
</pallas_src>

<mosaic_0001>
module attributes {stable_mosaic.version = 11 : i64} {
  func.func @hypergraph_conv_kernel(%arg0: i32, %arg1: memref<8x8x8xf32, #tpu.memory_space<vmem>>, %arg2: memref<8x8x128xf32, #tpu.memory_space<vmem>>, %arg3: memref<1x8xf32, #tpu.memory_space<vmem>>, %arg4: memref<8x8x128xf32, #tpu.memory_space<vmem>>) attributes {dimension_semantics = [#tpu.dimension_semantics<parallel>], iteration_bounds = array<i64: 1>, scalar_prefetch = 0 : i64, scratch_operands = 0 : i64, tpu.core_type = #tpu.core_type<tc>, window_params = [{transform_indices = @transform_0, window_bounds = array<i64: 8, 8, 8>}, {transform_indices = @transform_1, window_bounds = array<i64: 8, 8, 128>}, {pipeline_mode = #tpu.pipeline_mode<synchronous>, transform_indices = @transform_2, window_bounds = array<i64: 1, 8>}, {transform_indices = @transform_3, window_bounds = array<i64: 8, 8, 128>}]} {
    %c0 = arith.constant 0 : index
    %c0_0 = arith.constant 0 : index
    %c0_1 = arith.constant 0 : index
    %0 = vector.load %arg1[%c0, %c0_0, %c0_1] : memref<8x8x8xf32, #tpu.memory_space<vmem>>, vector<8x8x8xf32>
    %c0_2 = arith.constant 0 : index
    %c0_3 = arith.constant 0 : index
    %c0_4 = arith.constant 0 : index
    %1 = vector.load %arg2[%c0_2, %c0_3, %c0_4] : memref<8x8x128xf32, #tpu.memory_space<vmem>>, vector<8x8x128xf32>
    %c0_5 = arith.constant 0 : index
    %c0_6 = arith.constant 0 : index
    %2 = vector.load %arg3[%c0_5, %c0_6] : memref<1x8xf32, #tpu.memory_space<vmem>>, vector<1x8xf32>
    %3 = vector.shape_cast %2 : vector<1x8xf32> to vector<1x1x8xf32>
    %4 = vector.broadcast %3 : vector<1x1x8xf32> to vector<8x8x8xf32>
    %5 = arith.mulf %0, %4 : vector<8x8x8xf32>
    %cst = arith.constant dense<0.000000e+00> : vector<8x8xf32>
    %6 = vector.multi_reduction <add>, %5, %cst [2] : vector<8x8x8xf32> to vector<8x8xf32>
    %7 = math.rsqrt %6 : vector<8x8xf32>
    %cst_7 = arith.constant 0x7F800000 : f32
    %8 = vector.broadcast %cst_7 : f32 to vector<8x8xf32>
    %9 = arith.cmpf oeq, %7, %8 : vector<8x8xf32>
    %cst_8 = arith.constant 0.000000e+00 : f32
    %10 = vector.broadcast %cst_8 : f32 to vector<8x8xf32>
    %11 = arith.select %9, %10, %7 : vector<8x8xi1>, vector<8x8xf32>
    %cst_9 = arith.constant dense<0.000000e+00> : vector<8x8xf32>
    %12 = vector.multi_reduction <add>, %0, %cst_9 [1] : vector<8x8x8xf32> to vector<8x8xf32>
    %cst_10 = arith.constant 1.000000e+00 : f32
    %13 = vector.broadcast %cst_10 : f32 to vector<8x8xf32>
    %14 = arith.divf %13, %12 : vector<8x8xf32>
    %cst_11 = arith.constant 0x7F800000 : f32
    %15 = vector.broadcast %cst_11 : f32 to vector<8x8xf32>
    %16 = arith.cmpf oeq, %14, %15 : vector<8x8xf32>
    %cst_12 = arith.constant 0.000000e+00 : f32
    %17 = vector.broadcast %cst_12 : f32 to vector<8x8xf32>
    %18 = arith.select %16, %17, %14 : vector<8x8xi1>, vector<8x8xf32>
    %19 = vector.shape_cast %11 : vector<8x8xf32> to vector<8x8x1xf32>
    %20 = vector.broadcast %19 : vector<8x8x1xf32> to vector<8x8x8xf32>
    %21 = arith.mulf %0, %20 : vector<8x8x8xf32>
    %22 = vector.broadcast %2 : vector<1x8xf32> to vector<8x8xf32>
    %23 = arith.mulf %22, %18 : vector<8x8xf32>
    %24 = vector.shape_cast %23 : vector<8x8xf32> to vector<8x1x8xf32>
    %25 = vector.broadcast %24 : vector<8x1x8xf32> to vector<8x8x8xf32>
    %26 = arith.mulf %21, %25 : vector<8x8x8xf32>
    %cst_13 = arith.constant 0.000000e+00 : f32
    %27 = vector.broadcast %cst_13 : f32 to vector<8x8x128xf32>
    %28 = vector.extract_strided_slice %21 {offsets = [0, 0, 0], sizes = [8, 8, 1], strides = [1, 1, 1]} : vector<8x8x8xf32> to vector<8x8x1xf32>
    %29 = vector.broadcast %28 : vector<8x8x1xf32> to vector<8x8x128xf32>
    %30 = arith.mulf %29, %1 : vector<8x8x128xf32>
    %cst_14 = arith.constant dense<0.000000e+00> : vector<8x128xf32>
    %31 = vector.multi_reduction <add>, %30, %cst_14 [1] : vector<8x8x128xf32> to vector<8x128xf32>
    %32 = vector.shape_cast %31 : vector<8x128xf32> to vector<8x1x128xf32>
    %33 = vector.extract_strided_slice %26 {offsets = [0, 0, 0], sizes = [8, 8, 1], strides = [1, 1, 1]} : vector<8x8x8xf32> to vector<8x8x1xf32>
    %34 = vector.broadcast %33 : vector<8x8x1xf32> to vector<8x8x128xf32>
    %35 = vector.broadcast %32 : vector<8x1x128xf32> to vector<8x8x128xf32>
    %36 = arith.mulf %34, %35 : vector<8x8x128xf32>
    %37 = arith.addf %27, %36 : vector<8x8x128xf32>
    %38 = vector.extract_strided_slice %21 {offsets = [0, 0, 1], sizes = [8, 8, 1], strides = [1, 1, 1]} : vector<8x8x8xf32> to vector<8x8x1xf32>
    %39 = vector.broadcast %38 : vector<8x8x1xf32> to vector<8x8x128xf32>
    %40 = arith.mulf %39, %1 : vector<8x8x128xf32>
    %cst_15 = arith.constant dense<0.000000e+00> : vector<8x128xf32>
    %41 = vector.multi_reduction <add>, %40, %cst_15 [1] : vector<8x8x128xf32> to vector<8x128xf32>
    %42 = vector.shape_cast %41 : vector<8x128xf32> to vector<8x1x128xf32>
    %43 = vector.extract_strided_slice %26 {offsets = [0, 0, 1], sizes = [8, 8, 1], strides = [1, 1, 1]} : vector<8x8x8xf32> to vector<8x8x1xf32>
    %44 = vector.broadcast %43 : vector<8x8x1xf32> to vector<8x8x128xf32>
    %45 = vector.broadcast %42 : vector<8x1x128xf32> to vector<8x8x128xf32>
    %46 = arith.mulf %44, %45 : vector<8x8x128xf32>
    %47 = arith.addf %37, %46 : vector<8x8x128xf32>
    %48 = vector.extract_strided_slice %21 {offsets = [0, 0, 2], sizes = [8, 8, 1], strides = [1, 1, 1]} : vector<8x8x8xf32> to vector<8x8x1xf32>
    %49 = vector.broadcast %48 : vector<8x8x1xf32> to vector<8x8x128xf32>
    %50 = arith.mulf %49, %1 : vector<8x8x128xf32>
    %cst_16 = arith.constant dense<0.000000e+00> : vector<8x128xf32>
    %51 = vector.multi_reduction <add>, %50, %cst_16 [1] : vector<8x8x128xf32> to vector<8x128xf32>
    %52 = vector.shape_cast %51 : vector<8x128xf32> to vector<8x1x128xf32>
    %53 = vector.extract_strided_slice %26 {offsets = [0, 0, 2], sizes = [8, 8, 1], strides = [1, 1, 1]} : vector<8x8x8xf32> to vector<8x8x1xf32>
    %54 = vector.broadcast %53 : vector<8x8x1xf32> to vector<8x8x128xf32>
    %55 = vector.broadcast %52 : vector<8x1x128xf32> to vector<8x8x128xf32>
    %56 = arith.mulf %54, %55 : vector<8x8x128xf32>
    %57 = arith.addf %47, %56 : vector<8x8x128xf32>
    %58 = vector.extract_strided_slice %21 {offsets = [0, 0, 3], sizes = [8, 8, 1], strides = [1, 1, 1]} : vector<8x8x8xf32> to vector<8x8x1xf32>
    %59 = vector.broadcast %58 : vector<8x8x1xf32> to vector<8x8x128xf32>
    %60 = arith.mulf %59, %1 : vector<8x8x128xf32>
    %cst_17 = arith.constant dense<0.000000e+00> : vector<8x128xf32>
    %61 = vector.multi_reduction <add>, %60, %cst_17 [1] : vector<8x8x128xf32> to vector<8x128xf32>
    %62 = vector.shape_cast %61 : vector<8x128xf32> to vector<8x1x128xf32>
    %63 = vector.extract_strided_slice %26 {offsets = [0, 0, 3], sizes = [8, 8, 1], strides = [1, 1, 1]} : vector<8x8x8xf32> to vector<8x8x1xf32>
    %64 = vector.broadcast %63 : vector<8x8x1xf32> to vector<8x8x128xf32>
    %65 = vector.broadcast %62 : vector<8x1x128xf32> to vector<8x8x128xf32>
    %66 = arith.mulf %64, %65 : vector<8x8x128xf32>
    %67 = arith.addf %57, %66 : vector<8x8x128xf32>
    %68 = vector.extract_strided_slice %21 {offsets = [0, 0, 4], sizes = [8, 8, 1], strides = [1, 1, 1]} : vector<8x8x8xf32> to vector<8x8x1xf32>
    %69 = vector.broadcast %68 : vector<8x8x1xf32> to vector<8x8x128xf32>
    %70 = arith.mulf %69, %1 : vector<8x8x128xf32>
    %cst_18 = arith.constant dense<0.000000e+00> : vector<8x128xf32>
    %71 = vector.multi_reduction <add>, %70, %cst_18 [1] : vector<8x8x128xf32> to vector<8x128xf32>
    %72 = vector.shape_cast %71 : vector<8x128xf32> to vector<8x1x128xf32>
    %73 = vector.extract_strided_slice %26 {offsets = [0, 0, 4], sizes = [8, 8, 1], strides = [1, 1, 1]} : vector<8x8x8xf32> to vector<8x8x1xf32>
    %74 = vector.broadcast %73 : vector<8x8x1xf32> to vector<8x8x128xf32>
    %75 = vector.broadcast %72 : vector<8x1x128xf32> to vector<8x8x128xf32>
    %76 = arith.mulf %74, %75 : vector<8x8x128xf32>
    %77 = arith.addf %67, %76 : vector<8x8x128xf32>
    %78 = vector.extract_strided_slice %21 {offsets = [0, 0, 5], sizes = [8, 8, 1], strides = [1, 1, 1]} : vector<8x8x8xf32> to vector<8x8x1xf32>
    %79 = vector.broadcast %78 : vector<8x8x1xf32> to vector<8x8x128xf32>
    %80 = arith.mulf %79, %1 : vector<8x8x128xf32>
    %cst_19 = arith.constant dense<0.000000e+00> : vector<8x128xf32>
    %81 = vector.multi_reduction <add>, %80, %cst_19 [1] : vector<8x8x128xf32> to vector<8x128xf32>
    %82 = vector.shape_cast %81 : vector<8x128xf32> to vector<8x1x128xf32>
    %83 = vector.extract_strided_slice %26 {offsets = [0, 0, 5], sizes = [8, 8, 1], strides = [1, 1, 1]} : vector<8x8x8xf32> to vector<8x8x1xf32>
    %84 = vector.broadcast %83 : vector<8x8x1xf32> to vector<8x8x128xf32>
    %85 = vector.broadcast %82 : vector<8x1x128xf32> to vector<8x8x128xf32>
    %86 = arith.mulf %84, %85 : vector<8x8x128xf32>
    %87 = arith.addf %77, %86 : vector<8x8x128xf32>
    %88 = vector.extract_strided_slice %21 {offsets = [0, 0, 6], sizes = [8, 8, 1], strides = [1, 1, 1]} : vector<8x8x8xf32> to vector<8x8x1xf32>
    %89 = vector.broadcast %88 : vector<8x8x1xf32> to vector<8x8x128xf32>
    %90 = arith.mulf %89, %1 : vector<8x8x128xf32>
    %cst_20 = arith.constant dense<0.000000e+00> : vector<8x128xf32>
    %91 = vector.multi_reduction <add>, %90, %cst_20 [1] : vector<8x8x128xf32> to vector<8x128xf32>
    %92 = vector.shape_cast %91 : vector<8x128xf32> to vector<8x1x128xf32>
    %93 = vector.extract_strided_slice %26 {offsets = [0, 0, 6], sizes = [8, 8, 1], strides = [1, 1, 1]} : vector<8x8x8xf32> to vector<8x8x1xf32>
    %94 = vector.broadcast %93 : vector<8x8x1xf32> to vector<8x8x128xf32>
    %95 = vector.broadcast %92 : vector<8x1x128xf32> to vector<8x8x128xf32>
    %96 = arith.mulf %94, %95 : vector<8x8x128xf32>
    %97 = arith.addf %87, %96 : vector<8x8x128xf32>
    %98 = vector.extract_strided_slice %21 {offsets = [0, 0, 7], sizes = [8, 8, 1], strides = [1, 1, 1]} : vector<8x8x8xf32> to vector<8x8x1xf32>
    %99 = vector.broadcast %98 : vector<8x8x1xf32> to vector<8x8x128xf32>
    %100 = arith.mulf %99, %1 : vector<8x8x128xf32>
    %cst_21 = arith.constant dense<0.000000e+00> : vector<8x128xf32>
    %101 = vector.multi_reduction <add>, %100, %cst_21 [1] : vector<8x8x128xf32> to vector<8x128xf32>
    %102 = vector.shape_cast %101 : vector<8x128xf32> to vector<8x1x128xf32>
    %103 = vector.extract_strided_slice %26 {offsets = [0, 0, 7], sizes = [8, 8, 1], strides = [1, 1, 1]} : vector<8x8x8xf32> to vector<8x8x1xf32>
    %104 = vector.broadcast %103 : vector<8x8x1xf32> to vector<8x8x128xf32>
    %105 = vector.broadcast %102 : vector<8x1x128xf32> to vector<8x8x128xf32>
    %106 = arith.mulf %104, %105 : vector<8x8x128xf32>
    %107 = arith.addf %97, %106 : vector<8x8x128xf32>
    %c0_22 = arith.constant 0 : index
    %c0_23 = arith.constant 0 : index
    %c0_24 = arith.constant 0 : index
    %108 = vector.load %arg4[%c0_22, %c0_23, %c0_24] : memref<8x8x128xf32, #tpu.memory_space<vmem>>, vector<8x8x128xf32>
    tpu.vector_store %arg4[%c0_22, %c0_23, %c0_24], %107 {strides = array<i32>} : memref<8x8x128xf32, #tpu.memory_space<vmem>>, vector<8x8x128xf32>,
    return
  }
  func.func @transform_0(%arg0: i32) -> (i32, i32, i32) {
    %c0_i32 = arith.constant 0 : i32
    %c0_i32_0 = arith.constant 0 : i32
    %c0_i32_1 = arith.constant 0 : i32
    return %arg0, %c0_i32, %c0_i32_0 : i32, i32, i32
  }
  func.func @transform_1(%arg0: i32) -> (i32, i32, i32) {
    %c0_i32 = arith.constant 0 : i32
    %c0_i32_0 = arith.constant 0 : i32
    %c0_i32_1 = arith.constant 0 : i32
    return %arg0, %c0_i32, %c0_i32_0 : i32, i32, i32
  }
  func.func @transform_2(%arg0: i32) -> (i32, i32) {
    %c0_i32 = arith.constant 0 : i32
    %c0_i32_0 = arith.constant 0 : i32
    %c0_i32_1 = arith.constant 0 : i32
    return %c0_i32, %c0_i32_0 : i32, i32
  }
  func.func @transform_3(%arg0: i32) -> (i32, i32, i32) {
    %c0_i32 = arith.constant 0 : i32
    %c0_i32_0 = arith.constant 0 : i32
    %c0_i32_1 = arith.constant 0 : i32
    return %arg0, %c0_i32, %c0_i32_0 : i32, i32, i32
  }
}

</mosaic_0001>

<llo_original>
// kernel: tpu_custom_call.1
$region0: #{tpu_custom_call.1}
  #allocation0 [shape = 'u32[]', space=smem, size = 0x4, offset = 0x4, fixed_abs, tag = 'smem constant byte address 0x4 - core index']
  #allocation1 [shape = 'u32[72,128]{1,0:T(1,128)}', space=vmem, size = 0x9000, scoped, tag = 'internal scratch']
  %s0 = inlined_call_operand.hbm [shape: f32[8,8,8], index: 0, kind: input, shape index: {}]
  %s1 = inlined_call_operand.hbm [shape: f32[8,8,128], index: 1, kind: input, shape index: {}]
  %s2 = inlined_call_operand.vmem [shape: f32[1,8], index: 2, kind: input, shape index: {}]
  %s3 = inlined_call_operand.hbm [shape: f32[8,8,128], index: 3, kind: output, shape index: {}]
  %s4 = sld [smem:[#allocation0]]
  $region30: #{tpu_custom_call.1} parent=0
    _
  %s6 = ssub.s32 1, %s4
  %s7 = scalar_select 0, %s6, %s4
  $region1: #{tpu_custom_call.1} parent=0
    #allocation2 [shape = 'u8[32768]{0}', space=vmem, size = 0x8000, scoped, tag = 'input window, operand 0, single buffered']
    #allocation3 [shape = 's32[1]{0}', space=sflag, size = 0x4, scoped, tag = 'scoped memory for tpu_custom_call.1']
    #allocation4 [shape = 's32[1]{0}', space=sflag, size = 0x4, scoped, tag = 'scoped memory for tpu_custom_call.1']
    #allocation5 [shape = 'u8[32768]{0}', space=vmem, size = 0x8000, scoped, tag = 'input window, operand 1, single buffered']
    #allocation6 [shape = 's32[1]{0}', space=sflag, size = 0x4, scoped, tag = 'scoped memory for tpu_custom_call.1']
    #allocation7 [shape = 'u8[32768]{0}', space=vmem, size = 0x8000, scoped, tag = 'output window, operand 0, single buffered']
    %8 = vsyncpa [#allocation3], 0
    %9 = vsyncpa [#allocation6], 0
    %10 = vsyncpa [#allocation4], 0
    // Predicated region
    $region2: #{tpu_custom_call.1} parent=1 // pred_check
      _
    $region3: #{tpu_custom_call.1} parent=1 // pred_check_branch
      %12 = sbr.rel (0) target = $region5
    $region4: #{tpu_custom_call.1} parent=1 // pred_region
      %14 = vsyncadd [#allocation3], 0
      %s15 = sshll.u32 %s0, 4
      %s16 = int_to_ptr.hbm [resolvable:$true] %s15
      %s17 = sshll.u32 [#allocation2], 4
      %s18 = int_to_ptr.vmem [resolvable:$true] %s17
      %23 = dma.hbm_to_vmem [thread:$0]  %s16, 1024, %s18, [#allocation3], 128, 128, 8
    $region5: #{tpu_custom_call.1} parent=1 // pred_fallthru
      _
    // Predicated region
    $region6: #{tpu_custom_call.1} parent=1 // pred_check
      _
    $region7: #{tpu_custom_call.1} parent=1 // pred_check_branch
      %25 = sbr.rel (0) target = $region9
    $region8: #{tpu_custom_call.1} parent=1 // pred_region
      %27 = vsyncadd [#allocation6], 0
      %s28 = sshll.u32 %s1, 4
      %s29 = int_to_ptr.hbm [resolvable:$true] %s28
      %s30 = sshll.u32 [#allocation5], 4
      %s31 = int_to_ptr.vmem [resolvable:$true] %s30
      %36 = dma.hbm_to_vmem [thread:$0]  %s29, 1024, %s31, [#allocation6], 128, 128, 8
    $region9: #{tpu_custom_call.1} parent=1 // pred_fallthru
      _
    // Predicated region
    $region10: #{tpu_custom_call.1} parent=1 // pred_check
      _
    $region11: #{tpu_custom_call.1} parent=1 // pred_check_branch
      %38 = sbr.rel (0) target = $region13
    $region12: #{tpu_custom_call.1} parent=1 // pred_region
      _
    $region13: #{tpu_custom_call.1} parent=1 // pred_fallthru
      _
    // Predicated region
    $region14: #{tpu_custom_call.1} parent=1 // pred_check
      _
    $region15: #{tpu_custom_call.1} parent=1 // pred_check_branch
      %40 = sbr.rel (0) target = $region17
    $region16: #{tpu_custom_call.1} parent=1 // pred_region
      %42 = dma.done [#allocation3], 1024
    $region17: #{tpu_custom_call.1} parent=1 // pred_fallthru
      _
    // Predicated region
    $region18: #{tpu_custom_call.1} parent=1 // pred_check
      _
    $region19: #{tpu_custom_call.1} parent=1 // pred_check_branch
      %44 = sbr.rel (0) target = $region21
    $region20: #{tpu_custom_call.1} parent=1 // pred_region
      %46 = dma.done [#allocation6], 1024
    $region21: #{tpu_custom_call.1} parent=1 // pred_fallthru
      _
    %v47 = vld [vmem:[#allocation2] sm:$0xff]
    %v48 = vld [vmem:[#allocation2 + $0x8] sm:$0xff]
    %v49 = vld [vmem:[#allocation2 + $0x10] sm:$0xff]
    %v50 = vld [vmem:[#allocation2 + $0x18] sm:$0xff]
    %v51 = vld [vmem:[#allocation2 + $0x20] sm:$0xff]
    %v52 = vld [vmem:[#allocation2 + $0x28] sm:$0xff]
    %v53 = vld [vmem:[#allocation2 + $0x30] sm:$0xff]
    %v54 = vld [vmem:[#allocation2 + $0x38] sm:$0xff]
    %v55 = vld [vmem:[#allocation5] sm:$0xff]
    %v56 = vld [vmem:[#allocation5 + $0x8] sm:$0xff]
    %v57 = vld [vmem:[#allocation5 + $0x10] sm:$0xff]
    %v58 = vld [vmem:[#allocation5 + $0x18] sm:$0xff]
    %v59 = vld [vmem:[#allocation5 + $0x20] sm:$0xff]
    %v60 = vld [vmem:[#allocation5 + $0x28] sm:$0xff]
    %v61 = vld [vmem:[#allocation5 + $0x30] sm:$0xff]
    %v62 = vld [vmem:[#allocation5 + $0x38] sm:$0xff]
    %v63 = vld [vmem:[%s2] sm:$0x1]
    %v65 = vperm.slane %v63, 0
    %v67 = vmul.f32 %v47, %v65
    %v68 = vmul.f32 %v48, %v65
    %v69 = vmul.f32 %v49, %v65
    %v70 = vmul.f32 %v50, %v65
    %v71 = vmul.f32 %v51, %v65
    %v72 = vmul.f32 %v52, %v65
    %v73 = vmul.f32 %v53, %v65
    %v74 = vmul.f32 %v54, %v65
    %vm75 = vcmask 64512
    %v76 = vsel %vm75, %v67, 0.0
    %77 = vadd.xlane.f32.xlu0 %v76
    %v78 = vpop.xlane.xlu0 %77
    %v79 = vsel %vm75, %v68, 0.0
    %80 = vadd.xlane.f32.xlu0 %v79
    %v81 = vpop.xlane.xlu0 %80
    %v82 = vsel %vm75, %v69, 0.0
    %83 = vadd.xlane.f32.xlu0 %v82
    %v84 = vpop.xlane.xlu0 %83
    %v85 = vsel %vm75, %v70, 0.0
    %86 = vadd.xlane.f32.xlu0 %v85
    %v87 = vpop.xlane.xlu0 %86
    %v88 = vsel %vm75, %v71, 0.0
    %89 = vadd.xlane.f32.xlu0 %v88
    %v90 = vpop.xlane.xlu0 %89
    %v91 = vsel %vm75, %v72, 0.0
    %92 = vadd.xlane.f32.xlu0 %v91
    %v93 = vpop.xlane.xlu0 %92
    %v94 = vsel %vm75, %v73, 0.0
    %95 = vadd.xlane.f32.xlu0 %v94
    %v96 = vpop.xlane.xlu0 %95
    %v97 = vsel %vm75, %v74, 0.0
    %98 = vadd.xlane.f32.xlu0 %v97
    %v99 = vpop.xlane.xlu0 %98
    %v100 = vrsqrt.pop %v78
    %v101 = vmul.f32 %v100, %v78
    %v102 = vmul.f32 %v101, %v100
    %v103 = vmul.f32 0.5, %v102
    %v104 = vsub.f32 1.5, %v103
    %v105 = vmul.f32 %v100, %v104
    %vm106 = vweird.f32 %v78
    %vm107 = vweird.f32 %v100
    %vm108 = vmor %vm106, %vm107
    %v109 = vsel %vm108, %v100, %v105
    %v110 = vrsqrt.pop %v81
    %v111 = vmul.f32 %v110, %v81
    %v112 = vmul.f32 %v111, %v110
    %v113 = vmul.f32 0.5, %v112
    %v114 = vsub.f32 1.5, %v113
    %v115 = vmul.f32 %v110, %v114
    %vm116 = vweird.f32 %v81
    %vm117 = vweird.f32 %v110
    %vm118 = vmor %vm116, %vm117
    %v119 = vsel %vm118, %v110, %v115
    %v120 = vrsqrt.pop %v84
    %v121 = vmul.f32 %v120, %v84
    %v122 = vmul.f32 %v121, %v120
    %v123 = vmul.f32 0.5, %v122
    %v124 = vsub.f32 1.5, %v123
    %v125 = vmul.f32 %v120, %v124
    %vm126 = vweird.f32 %v84
    %vm127 = vweird.f32 %v120
    %vm128 = vmor %vm126, %vm127
    %v129 = vsel %vm128, %v120, %v125
    %v130 = vrsqrt.pop %v87
    %v131 = vmul.f32 %v130, %v87
    %v132 = vmul.f32 %v131, %v130
    %v133 = vmul.f32 0.5, %v132
    %v134 = vsub.f32 1.5, %v133
    %v135 = vmul.f32 %v130, %v134
    %vm136 = vweird.f32 %v87
    %vm137 = vweird.f32 %v130
    %vm138 = vmor %vm136, %vm137
    %v139 = vsel %vm138, %v130, %v135
    %v140 = vrsqrt.pop %v90
    %v141 = vmul.f32 %v140, %v90
    %v142 = vmul.f32 %v141, %v140
    %v143 = vmul.f32 0.5, %v142
    %v144 = vsub.f32 1.5, %v143
    %v145 = vmul.f32 %v140, %v144
    %vm146 = vweird.f32 %v90
    %vm147 = vweird.f32 %v140
    %vm148 = vmor %vm146, %vm147
    %v149 = vsel %vm148, %v140, %v145
    %v150 = vrsqrt.pop %v93
    %v151 = vmul.f32 %v150, %v93
    %v152 = vmul.f32 %v151, %v150
    %v153 = vmul.f32 0.5, %v152
    %v154 = vsub.f32 1.5, %v153
    %v155 = vmul.f32 %v150, %v154
    %vm156 = vweird.f32 %v93
    %vm157 = vweird.f32 %v150
    %vm158 = vmor %vm156, %vm157
    %v159 = vsel %vm158, %v150, %v155
    %v160 = vrsqrt.pop %v96
    %v161 = vmul.f32 %v160, %v96
    %v162 = vmul.f32 %v161, %v160
    %v163 = vmul.f32 0.5, %v162
    %v164 = vsub.f32 1.5, %v163
    %v165 = vmul.f32 %v160, %v164
    %vm166 = vweird.f32 %v96
    %vm167 = vweird.f32 %v160
    %vm168 = vmor %vm166, %vm167
    %v169 = vsel %vm168, %v160, %v165
    %v170 = vrsqrt.pop %v99
    %v171 = vmul.f32 %v170, %v99
    %v172 = vmul.f32 %v171, %v170
    %v173 = vmul.f32 0.5, %v172
    %v174 = vsub.f32 1.5, %v173
    %v175 = vmul.f32 %v170, %v174
    %vm176 = vweird.f32 %v99
    %vm177 = vweird.f32 %v170
    %vm178 = vmor %vm176, %vm177
    %v179 = vsel %vm178, %v170, %v175
    %vm180 = vcmp.eq.f32.partialorder %v109, inf
    %vm181 = vcmp.eq.f32.partialorder %v119, inf
    %vm182 = vcmp.eq.f32.partialorder %v129, inf
    %vm183 = vcmp.eq.f32.partialorder %v139, inf
    %vm184 = vcmp.eq.f32.partialorder %v149, inf
    %vm185 = vcmp.eq.f32.partialorder %v159, inf
    %vm186 = vcmp.eq.f32.partialorder %v169, inf
    %vm187 = vcmp.eq.f32.partialorder %v179, inf
    %v188 = vsel %vm180, 0.0, %v109
    %v189 = vsel %vm181, 0.0, %v119
    %v190 = vsel %vm182, 0.0, %v129
    %v191 = vsel %vm183, 0.0, %v139
    %v192 = vsel %vm184, 0.0, %v149
    %v193 = vsel %vm185, 0.0, %v159
    %v194 = vsel %vm186, 0.0, %v169
    %v195 = vsel %vm187, 0.0, %v179
    %v196 = vsel %vm75, %v47, 0.0
    %v197 = vrot.slane %v196, 4
    %v198 = vadd.f32 %v196, %v197
    %v199 = vrot.slane %v198, 2
    %v200 = vadd.f32 %v198, %v199
    %v201 = vrot.slane %v200, 1
    %v202 = vadd.f32 %v200, %v201
    %v203 = vsel %vm75, %v48, 0.0
    %v204 = vrot.slane %v203, 4
    %v205 = vadd.f32 %v203, %v204
    %v206 = vrot.slane %v205, 2
    %v207 = vadd.f32 %v205, %v206
    %v208 = vrot.slane %v207, 1
    %v209 = vadd.f32 %v207, %v208
    %v210 = vsel %vm75, %v49, 0.0
    %v211 = vrot.slane %v210, 4
    %v212 = vadd.f32 %v210, %v211
    %v213 = vrot.slane %v212, 2
    %v214 = vadd.f32 %v212, %v213
    %v215 = vrot.slane %v214, 1
    %v216 = vadd.f32 %v214, %v215
    %v217 = vsel %vm75, %v50, 0.0
    %v218 = vrot.slane %v217, 4
    %v219 = vadd.f32 %v217, %v218
    %v220 = vrot.slane %v219, 2
    %v221 = vadd.f32 %v219, %v220
    %v222 = vrot.slane %v221, 1
    %v223 = vadd.f32 %v221, %v222
    %v224 = vsel %vm75, %v51, 0.0
    %v225 = vrot.slane %v224, 4
    %v226 = vadd.f32 %v224, %v225
    %v227 = vrot.slane %v226, 2
    %v228 = vadd.f32 %v226, %v227
    %v229 = vrot.slane %v228, 1
    %v230 = vadd.f32 %v228, %v229
    %v231 = vsel %vm75, %v52, 0.0
    %v232 = vrot.slane %v231, 4
    %v233 = vadd.f32 %v231, %v232
    %v234 = vrot.slane %v233, 2
    %v235 = vadd.f32 %v233, %v234
    %v236 = vrot.slane %v235, 1
    %v237 = vadd.f32 %v235, %v236
    %v238 = vsel %vm75, %v53, 0.0
    %v239 = vrot.slane %v238, 4
    %v240 = vadd.f32 %v238, %v239
    %v241 = vrot.slane %v240, 2
    %v242 = vadd.f32 %v240, %v241
    %v243 = vrot.slane %v242, 1
    %v244 = vadd.f32 %v242, %v243
    %v245 = vsel %vm75, %v54, 0.0
    %v246 = vrot.slane %v245, 4
    %v247 = vadd.f32 %v245, %v246
    %v248 = vrot.slane %v247, 2
    %v249 = vadd.f32 %v247, %v248
    %v250 = vrot.slane %v249, 1
    %v251 = vadd.f32 %v249, %v250
    %v252 = vrcp.pop %v202
    %v253 = vmul.f32 %v202, %v252
    %v254 = vsub.f32 1.0, %v253
    %v255 = vmul.f32 %v252, %v254
    %v256 = vadd.f32 %v252, %v255
    %vm257 = vweird.f32 %v202
    %vm258 = vweird.f32 %v252
    %vm259 = vmor %vm257, %vm258
    %v260 = vsel %vm259, %v252, %v256
    %v261 = vand.u32 2147483647, %v202
    %vm262 = vcmp.eq.f32.partialorder %v261, 8.507059e+37
    %v263 = vand.u32 %v202, 2147483648
    %v264 = vor.u32 1.1754944e-38, %v263
    %v265 = vsel %vm262, %v264, %v260
    %v266 = vmul.f32 1.0, %v265
    %v267 = vrcp.pop %v209
    %v268 = vmul.f32 %v209, %v267
    %v269 = vsub.f32 1.0, %v268
    %v270 = vmul.f32 %v267, %v269
    %v271 = vadd.f32 %v267, %v270
    %vm272 = vweird.f32 %v209
    %vm273 = vweird.f32 %v267
    %vm274 = vmor %vm272, %vm273
    %v275 = vsel %vm274, %v267, %v271
    %v276 = vand.u32 2147483647, %v209
    %vm277 = vcmp.eq.f32.partialorder %v276, 8.507059e+37
    %v278 = vand.u32 %v209, 2147483648
    %v279 = vor.u32 1.1754944e-38, %v278
    %v280 = vsel %vm277, %v279, %v275
    %v281 = vmul.f32 1.0, %v280
    %v282 = vrcp.pop %v216
    %v283 = vmul.f32 %v216, %v282
    %v284 = vsub.f32 1.0, %v283
    %v285 = vmul.f32 %v282, %v284
    %v286 = vadd.f32 %v282, %v285
    %vm287 = vweird.f32 %v216
    %vm288 = vweird.f32 %v282
    %vm289 = vmor %vm287, %vm288
    %v290 = vsel %vm289, %v282, %v286
    %v291 = vand.u32 2147483647, %v216
    %vm292 = vcmp.eq.f32.partialorder %v291, 8.507059e+37
    %v293 = vand.u32 %v216, 2147483648
    %v294 = vor.u32 1.1754944e-38, %v293
    %v295 = vsel %vm292, %v294, %v290
    %v296 = vmul.f32 1.0, %v295
    %v297 = vrcp.pop %v223
    %v298 = vmul.f32 %v223, %v297
    %v299 = vsub.f32 1.0, %v298
    %v300 = vmul.f32 %v297, %v299
    %v301 = vadd.f32 %v297, %v300
    %vm302 = vweird.f32 %v223
    %vm303 = vweird.f32 %v297
    %vm304 = vmor %vm302, %vm303
    %v305 = vsel %vm304, %v297, %v301
    %v306 = vand.u32 2147483647, %v223
    %vm307 = vcmp.eq.f32.partialorder %v306, 8.507059e+37
    %v308 = vand.u32 %v223, 2147483648
    %v309 = vor.u32 1.1754944e-38, %v308
    %v310 = vsel %vm307, %v309, %v305
    %v311 = vmul.f32 1.0, %v310
    %v312 = vrcp.pop %v230
    %v313 = vmul.f32 %v230, %v312
    %v314 = vsub.f32 1.0, %v313
    %v315 = vmul.f32 %v312, %v314
    %v316 = vadd.f32 %v312, %v315
    %vm317 = vweird.f32 %v230
    %vm318 = vweird.f32 %v312
    %vm319 = vmor %vm317, %vm318
    %v320 = vsel %vm319, %v312, %v316
    %v321 = vand.u32 2147483647, %v230
    %vm322 = vcmp.eq.f32.partialorder %v321, 8.507059e+37
    %v323 = vand.u32 %v230, 2147483648
    %v324 = vor.u32 1.1754944e-38, %v323
    %v325 = vsel %vm322, %v324, %v320
    %v326 = vmul.f32 1.0, %v325
    %v327 = vrcp.pop %v237
    %v328 = vmul.f32 %v237, %v327
    %v329 = vsub.f32 1.0, %v328
    %v330 = vmul.f32 %v327, %v329
    %v331 = vadd.f32 %v327, %v330
    %vm332 = vweird.f32 %v237
    %vm333 = vweird.f32 %v327
    %vm334 = vmor %vm332, %vm333
    %v335 = vsel %vm334, %v327, %v331
    %v336 = vand.u32 2147483647, %v237
    %vm337 = vcmp.eq.f32.partialorder %v336, 8.507059e+37
    %v338 = vand.u32 %v237, 2147483648
    %v339 = vor.u32 1.1754944e-38, %v338
    %v340 = vsel %vm337, %v339, %v335
    %v341 = vmul.f32 1.0, %v340
    %v342 = vrcp.pop %v244
    %v343 = vmul.f32 %v244, %v342
    %v344 = vsub.f32 1.0, %v343
    %v345 = vmul.f32 %v342, %v344
    %v346 = vadd.f32 %v342, %v345
    %vm347 = vweird.f32 %v244
    %vm348 = vweird.f32 %v342
    %vm349 = vmor %vm347, %vm348
    %v350 = vsel %vm349, %v342, %v346
    %v351 = vand.u32 2147483647, %v244
    %vm352 = vcmp.eq.f32.partialorder %v351, 8.507059e+37
    %v353 = vand.u32 %v244, 2147483648
    %v354 = vor.u32 1.1754944e-38, %v353
    %v355 = vsel %vm352, %v354, %v350
    %v356 = vmul.f32 1.0, %v355
    %v357 = vrcp.pop %v251
    %v358 = vmul.f32 %v251, %v357
    %v359 = vsub.f32 1.0, %v358
    %v360 = vmul.f32 %v357, %v359
    %v361 = vadd.f32 %v357, %v360
    %vm362 = vweird.f32 %v251
    %vm363 = vweird.f32 %v357
    %vm364 = vmor %vm362, %vm363
    %v365 = vsel %vm364, %v357, %v361
    %v366 = vand.u32 2147483647, %v251
    %vm367 = vcmp.eq.f32.partialorder %v366, 8.507059e+37
    %v368 = vand.u32 %v251, 2147483648
    %v369 = vor.u32 1.1754944e-38, %v368
    %v370 = vsel %vm367, %v369, %v365
    %v371 = vmul.f32 1.0, %v370
    %vm372 = vcmp.eq.f32.partialorder %v266, inf
    %vm373 = vcmp.eq.f32.partialorder %v281, inf
    %vm374 = vcmp.eq.f32.partialorder %v296, inf
    %vm375 = vcmp.eq.f32.partialorder %v311, inf
    %vm376 = vcmp.eq.f32.partialorder %v326, inf
    %vm377 = vcmp.eq.f32.partialorder %v341, inf
    %vm378 = vcmp.eq.f32.partialorder %v356, inf
    %vm379 = vcmp.eq.f32.partialorder %v371, inf
    %v380 = vsel %vm372, 0.0, %v266
    %v381 = vsel %vm373, 0.0, %v281
    %v382 = vsel %vm374, 0.0, %v296
    %v383 = vsel %vm375, 0.0, %v311
    %v384 = vsel %vm376, 0.0, %v326
    %v385 = vsel %vm377, 0.0, %v341
    %v386 = vsel %vm378, 0.0, %v356
    %v387 = vsel %vm379, 0.0, %v371
    %v388 = vmul.f32 %v47, %v188
    %v389 = vmul.f32 %v48, %v189
    %v390 = vmul.f32 %v49, %v190
    %v391 = vmul.f32 %v50, %v191
    %v392 = vmul.f32 %v51, %v192
    %v393 = vmul.f32 %v52, %v193
    %v394 = vmul.f32 %v53, %v194
    %v395 = vmul.f32 %v54, %v195
    %vm404 = vcmask 1041409
    %v405 = vsel %vm404, %v381, %v380
    %vm406 = vcmask 1042434
    %v407 = vsel %vm406, %v382, %v405
    %vm408 = vcmask 1043459
    %v409 = vsel %vm408, %v383, %v407
    %vm410 = vcmask 1044484
    %v411 = vsel %vm410, %v384, %v409
    %vm412 = vcmask 1045509
    %v413 = vsel %vm412, %v385, %v411
    %vm414 = vcmask 1046534
    %v415 = vsel %vm414, %v386, %v413
    %vm416 = vcmask 1047559
    %v417 = vsel %vm416, %v387, %v415
    %v419 = vmul.f32 %v65, %v417
    %v421 = vrot.slane %v419, 1
    %v422 = vrot.slane %v419, 2
    %v423 = vrot.slane %v419, 3
    %v424 = vrot.slane %v419, 4
    %v425 = vrot.slane %v419, 5
    %v426 = vrot.slane %v419, 6
    %v427 = vrot.slane %v419, 7
    %v428 = vperm.slane %v419, 0
    %v429 = vperm.slane %v421, 0
    %v430 = vperm.slane %v422, 0
    %v431 = vperm.slane %v423, 0
    %v432 = vperm.slane %v424, 0
    %v433 = vperm.slane %v425, 0
    %v434 = vperm.slane %v426, 0
    %v435 = vperm.slane %v427, 0
    %v444 = vmul.f32 %v388, %v428
    %v445 = vmul.f32 %v389, %v429
    %v446 = vmul.f32 %v390, %v430
    %v447 = vmul.f32 %v391, %v431
    %v448 = vmul.f32 %v392, %v432
    %v449 = vmul.f32 %v393, %v433
    %v450 = vmul.f32 %v394, %v434
    %v451 = vmul.f32 %v395, %v435
    %453 = vset.pattern.permute.xlu0 0
    %454 = vperm.xlu0 %453, %v388
    %v455 = vpop.permute.xlu0 %454
    %458 = vset.pattern.permute.xlu0 0
    %459 = vperm.xlu0 %458, %v389
    %v460 = vpop.permute.xlu0 %459
    %463 = vset.pattern.permute.xlu0 0
    %464 = vperm.xlu0 %463, %v390
    %v465 = vpop.permute.xlu0 %464
    %468 = vset.pattern.permute.xlu0 0
    %469 = vperm.xlu0 %468, %v391
    %v470 = vpop.permute.xlu0 %469
    %473 = vset.pattern.permute.xlu0 0
    %474 = vperm.xlu0 %473, %v392
    %v475 = vpop.permute.xlu0 %474
    %478 = vset.pattern.permute.xlu0 0
    %479 = vperm.xlu0 %478, %v393
    %v480 = vpop.permute.xlu0 %479
    %483 = vset.pattern.permute.xlu0 0
    %484 = vperm.xlu0 %483, %v394
    %v485 = vpop.permute.xlu0 %484
    %488 = vset.pattern.permute.xlu0 0
    %489 = vperm.xlu0 %488, %v395
    %v490 = vpop.permute.xlu0 %489
    %v492 = vmul.f32 %v455, %v55
    %v493 = vmul.f32 %v460, %v56
    %v494 = vmul.f32 %v465, %v57
    %v495 = vmul.f32 %v470, %v58
    %v496 = vmul.f32 %v475, %v59
    %v497 = vmul.f32 %v480, %v60
    %v498 = vmul.f32 %v485, %v61
    %v499 = vmul.f32 %v490, %v62
    %v500 = vrot.slane %v492, 4
    %v501 = vadd.f32 %v492, %v500
    %v502 = vrot.slane %v501, 2
    %v503 = vadd.f32 %v501, %v502
    %v504 = vrot.slane %v503, 1
    %v505 = vadd.f32 %v503, %v504
    %v506 = vrot.slane %v493, 4
    %v507 = vadd.f32 %v493, %v506
    %v508 = vrot.slane %v507, 2
    %v509 = vadd.f32 %v507, %v508
    %v510 = vrot.slane %v509, 1
    %v511 = vadd.f32 %v509, %v510
    %v512 = vrot.slane %v494, 4
    %v513 = vadd.f32 %v494, %v512
    %v514 = vrot.slane %v513, 2
    %v515 = vadd.f32 %v513, %v514
    %v516 = vrot.slane %v515, 1
    %v517 = vadd.f32 %v515, %v516
    %v518 = vrot.slane %v495, 4
    %v519 = vadd.f32 %v495, %v518
    %v520 = vrot.slane %v519, 2
    %v521 = vadd.f32 %v519, %v520
    %v522 = vrot.slane %v521, 1
    %v523 = vadd.f32 %v521, %v522
    %v524 = vrot.slane %v496, 4
    %v525 = vadd.f32 %v496, %v524
    %v526 = vrot.slane %v525, 2
    %v527 = vadd.f32 %v525, %v526
    %v528 = vrot.slane %v527, 1
    %v529 = vadd.f32 %v527, %v528
    %v530 = vrot.slane %v497, 4
    %v531 = vadd.f32 %v497, %v530
    %v532 = vrot.slane %v531, 2
    %v533 = vadd.f32 %v531, %v532
    %v534 = vrot.slane %v533, 1
    %v535 = vadd.f32 %v533, %v534
    %v536 = vrot.slane %v498, 4
    %v537 = vadd.f32 %v498, %v536
    %v538 = vrot.slane %v537, 2
    %v539 = vadd.f32 %v537, %v538
    %v540 = vrot.slane %v539, 1
    %v541 = vadd.f32 %v539, %v540
    %v542 = vrot.slane %v499, 4
    %v543 = vadd.f32 %v499, %v542
    %v544 = vrot.slane %v543, 2
    %v545 = vadd.f32 %v543, %v544
    %v546 = vrot.slane %v545, 1
    %v547 = vadd.f32 %v545, %v546
    %549 = vset.pattern.permute.xlu0 0
    %550 = vperm.xlu0 %549, %v444
    %v551 = vpop.permute.xlu0 %550
    %554 = vset.pattern.permute.xlu0 0
    %555 = vperm.xlu0 %554, %v445
    %v556 = vpop.permute.xlu0 %555
    %559 = vset.pattern.permute.xlu0 0
    %560 = vperm.xlu0 %559, %v446
    %v561 = vpop.permute.xlu0 %560
    %564 = vset.pattern.permute.xlu0 0
    %565 = vperm.xlu0 %564, %v447
    %v566 = vpop.permute.xlu0 %565
    %569 = vset.pattern.permute.xlu0 0
    %570 = vperm.xlu0 %569, %v448
    %v571 = vpop.permute.xlu0 %570
    %574 = vset.pattern.permute.xlu0 0
    %575 = vperm.xlu0 %574, %v449
    %v576 = vpop.permute.xlu0 %575
    %579 = vset.pattern.permute.xlu0 0
    %580 = vperm.xlu0 %579, %v450
    %v581 = vpop.permute.xlu0 %580
    %584 = vset.pattern.permute.xlu0 0
    %585 = vperm.xlu0 %584, %v451
    %v586 = vpop.permute.xlu0 %585
    %v588 = vmul.f32 %v551, %v505
    %v589 = vmul.f32 %v556, %v511
    %v590 = vmul.f32 %v561, %v517
    %v591 = vmul.f32 %v566, %v523
    %v592 = vmul.f32 %v571, %v529
    %v593 = vmul.f32 %v576, %v535
    %v594 = vmul.f32 %v581, %v541
    %v595 = vmul.f32 %v586, %v547
    %v596 = vadd.f32 %v588, 0.0
    %v597 = vadd.f32 %v589, 0.0
    %v598 = vadd.f32 %v590, 0.0
    %v599 = vadd.f32 %v591, 0.0
    %v600 = vadd.f32 %v592, 0.0
    %v601 = vadd.f32 %v593, 0.0
    %v602 = vadd.f32 %v594, 0.0
    %v603 = vadd.f32 %v595, 0.0
    %604 = vset.pattern.permute.xlu0 1
    %605 = vperm.xlu0 %604, %v388
    %v606 = vpop.permute.xlu0 %605
    %608 = vset.pattern.permute.xlu0 1
    %609 = vperm.xlu0 %608, %v389
    %v610 = vpop.permute.xlu0 %609
    %612 = vset.pattern.permute.xlu0 1
    %613 = vperm.xlu0 %612, %v390
    %v614 = vpop.permute.xlu0 %613
    %616 = vset.pattern.permute.xlu0 1
    %617 = vperm.xlu0 %616, %v391
    %v618 = vpop.permute.xlu0 %617
    %620 = vset.pattern.permute.xlu0 1
    %621 = vperm.xlu0 %620, %v392
    %v622 = vpop.permute.xlu0 %621
    %624 = vset.pattern.permute.xlu0 1
    %625 = vperm.xlu0 %624, %v393
    %v626 = vpop.permute.xlu0 %625
    %628 = vset.pattern.permute.xlu0 1
    %629 = vperm.xlu0 %628, %v394
    %v630 = vpop.permute.xlu0 %629
    %632 = vset.pattern.permute.xlu0 1
    %633 = vperm.xlu0 %632, %v395
    %v634 = vpop.permute.xlu0 %633
    %v636 = vmul.f32 %v606, %v55
    %v637 = vmul.f32 %v610, %v56
    %v638 = vmul.f32 %v614, %v57
    %v639 = vmul.f32 %v618, %v58
    %v640 = vmul.f32 %v622, %v59
    %v641 = vmul.f32 %v626, %v60
    %v642 = vmul.f32 %v630, %v61
    %v643 = vmul.f32 %v634, %v62
    %v644 = vrot.slane %v636, 4
    %v645 = vadd.f32 %v636, %v644
    %v646 = vrot.slane %v645, 2
    %v647 = vadd.f32 %v645, %v646
    %v648 = vrot.slane %v647, 1
    %v649 = vadd.f32 %v647, %v648
    %v650 = vrot.slane %v637, 4
    %v651 = vadd.f32 %v637, %v650
    %v652 = vrot.slane %v651, 2
    %v653 = vadd.f32 %v651, %v652
    %v654 = vrot.slane %v653, 1
    %v655 = vadd.f32 %v653, %v654
    %v656 = vrot.slane %v638, 4
    %v657 = vadd.f32 %v638, %v656
    %v658 = vrot.slane %v657, 2
    %v659 = vadd.f32 %v657, %v658
    %v660 = vrot.slane %v659, 1
    %v661 = vadd.f32 %v659, %v660
    %v662 = vrot.slane %v639, 4
    %v663 = vadd.f32 %v639, %v662
    %v664 = vrot.slane %v663, 2
    %v665 = vadd.f32 %v663, %v664
    %v666 = vrot.slane %v665, 1
    %v667 = vadd.f32 %v665, %v666
    %v668 = vrot.slane %v640, 4
    %v669 = vadd.f32 %v640, %v668
    %v670 = vrot.slane %v669, 2
    %v671 = vadd.f32 %v669, %v670
    %v672 = vrot.slane %v671, 1
    %v673 = vadd.f32 %v671, %v672
    %v674 = vrot.slane %v641, 4
    %v675 = vadd.f32 %v641, %v674
    %v676 = vrot.slane %v675, 2
    %v677 = vadd.f32 %v675, %v676
    %v678 = vrot.slane %v677, 1
    %v679 = vadd.f32 %v677, %v678
    %v680 = vrot.slane %v642, 4
    %v681 = vadd.f32 %v642, %v680
    %v682 = vrot.slane %v681, 2
    %v683 = vadd.f32 %v681, %v682
    %v684 = vrot.slane %v683, 1
    %v685 = vadd.f32 %v683, %v684
    %v686 = vrot.slane %v643, 4
    %v687 = vadd.f32 %v643, %v686
    %v688 = vrot.slane %v687, 2
    %v689 = vadd.f32 %v687, %v688
    %v690 = vrot.slane %v689, 1
    %v691 = vadd.f32 %v689, %v690
    %692 = vset.pattern.permute.xlu0 1
    %693 = vperm.xlu0 %692, %v444
    %v694 = vpop.permute.xlu0 %693
    %696 = vset.pattern.permute.xlu0 1
    %697 = vperm.xlu0 %696, %v445
    %v698 = vpop.permute.xlu0 %697
    %700 = vset.pattern.permute.xlu0 1
    %701 = vperm.xlu0 %700, %v446
    %v702 = vpop.permute.xlu0 %701
    %704 = vset.pattern.permute.xlu0 1
    %705 = vperm.xlu0 %704, %v447
    %v706 = vpop.permute.xlu0 %705
    %708 = vset.pattern.permute.xlu0 1
    %709 = vperm.xlu0 %708, %v448
    %v710 = vpop.permute.xlu0 %709
    %712 = vset.pattern.permute.xlu0 1
    %713 = vperm.xlu0 %712, %v449
    %v714 = vpop.permute.xlu0 %713
    %716 = vset.pattern.permute.xlu0 1
    %717 = vperm.xlu0 %716, %v450
    %v718 = vpop.permute.xlu0 %717
    %720 = vset.pattern.permute.xlu0 1
    %721 = vperm.xlu0 %720, %v451
    %v722 = vpop.permute.xlu0 %721
    %v724 = vmul.f32 %v694, %v649
    %v725 = vmul.f32 %v698, %v655
    %v726 = vmul.f32 %v702, %v661
    %v727 = vmul.f32 %v706, %v667
    %v728 = vmul.f32 %v710, %v673
    %v729 = vmul.f32 %v714, %v679
    %v730 = vmul.f32 %v718, %v685
    %v731 = vmul.f32 %v722, %v691
    %v732 = vadd.f32 %v596, %v724
    %v733 = vadd.f32 %v597, %v725
    %v734 = vadd.f32 %v598, %v726
    %v735 = vadd.f32 %v599, %v727
    %v736 = vadd.f32 %v600, %v728
    %v737 = vadd.f32 %v601, %v729
    %v738 = vadd.f32 %v602, %v730
    %v739 = vadd.f32 %v603, %v731
    %740 = vset.pattern.permute.xlu0 2
    %741 = vperm.xlu0 %740, %v388
    %v742 = vpop.permute.xlu0 %741
    %744 = vset.pattern.permute.xlu0 2
    %745 = vperm.xlu0 %744, %v389
    %v746 = vpop.permute.xlu0 %745
    %748 = vset.pattern.permute.xlu0 2
    %749 = vperm.xlu0 %748, %v390
    %v750 = vpop.permute.xlu0 %749
    %752 = vset.pattern.permute.xlu0 2
    %753 = vperm.xlu0 %752, %v391
    %v754 = vpop.permute.xlu0 %753
    %756 = vset.pattern.permute.xlu0 2
    %757 = vperm.xlu0 %756, %v392
    %v758 = vpop.permute.xlu0 %757
    %760 = vset.pattern.permute.xlu0 2
    %761 = vperm.xlu0 %760, %v393
    %v762 = vpop.permute.xlu0 %761
    %764 = vset.pattern.permute.xlu0 2
    %765 = vperm.xlu0 %764, %v394
    %v766 = vpop.permute.xlu0 %765
    %768 = vset.pattern.permute.xlu0 2
    %769 = vperm.xlu0 %768, %v395
    %v770 = vpop.permute.xlu0 %769
    %v772 = vmul.f32 %v742, %v55
    %v773 = vmul.f32 %v746, %v56
    %v774 = vmul.f32 %v750, %v57
    %v775 = vmul.f32 %v754, %v58
    %v776 = vmul.f32 %v758, %v59
    %v777 = vmul.f32 %v762, %v60
    %v778 = vmul.f32 %v766, %v61
    %v779 = vmul.f32 %v770, %v62
    %v780 = vrot.slane %v772, 4
    %v781 = vadd.f32 %v772, %v780
    %v782 = vrot.slane %v781, 2
    %v783 = vadd.f32 %v781, %v782
    %v784 = vrot.slane %v783, 1
    %v785 = vadd.f32 %v783, %v784
    %v786 = vrot.slane %v773, 4
    %v787 = vadd.f32 %v773, %v786
    %v788 = vrot.slane %v787, 2
    %v789 = vadd.f32 %v787, %v788
    %v790 = vrot.slane %v789, 1
    %v791 = vadd.f32 %v789, %v790
    %v792 = vrot.slane %v774, 4
    %v793 = vadd.f32 %v774, %v792
    %v794 = vrot.slane %v793, 2
    %v795 = vadd.f32 %v793, %v794
    %v796 = vrot.slane %v795, 1
    %v797 = vadd.f32 %v795, %v796
    %v798 = vrot.slane %v775, 4
    %v799 = vadd.f32 %v775, %v798
    %v800 = vrot.slane %v799, 2
    %v801 = vadd.f32 %v799, %v800
    %v802 = vrot.slane %v801, 1
    %v803 = vadd.f32 %v801, %v802
    %v804 = vrot.slane %v776, 4
    %v805 = vadd.f32 %v776, %v804
    %v806 = vrot.slane %v805, 2
    %v807 = vadd.f32 %v805, %v806
    %v808 = vrot.slane %v807, 1
    %v809 = vadd.f32 %v807, %v808
    %v810 = vrot.slane %v777, 4
    %v811 = vadd.f32 %v777, %v810
    %v812 = vrot.slane %v811, 2
    %v813 = vadd.f32 %v811, %v812
    %v814 = vrot.slane %v813, 1
    %v815 = vadd.f32 %v813, %v814
    %v816 = vrot.slane %v778, 4
    %v817 = vadd.f32 %v778, %v816
    %v818 = vrot.slane %v817, 2
    %v819 = vadd.f32 %v817, %v818
    %v820 = vrot.slane %v819, 1
    %v821 = vadd.f32 %v819, %v820
    %v822 = vrot.slane %v779, 4
    %v823 = vadd.f32 %v779, %v822
    %v824 = vrot.slane %v823, 2
    %v825 = vadd.f32 %v823, %v824
    %v826 = vrot.slane %v825, 1
    %v827 = vadd.f32 %v825, %v826
    %828 = vset.pattern.permute.xlu0 2
    %829 = vperm.xlu0 %828, %v444
    %v830 = vpop.permute.xlu0 %829
    %832 = vset.pattern.permute.xlu0 2
    %833 = vperm.xlu0 %832, %v445
    %v834 = vpop.permute.xlu0 %833
    %836 = vset.pattern.permute.xlu0 2
    %837 = vperm.xlu0 %836, %v446
    %v838 = vpop.permute.xlu0 %837
    %840 = vset.pattern.permute.xlu0 2
    %841 = vperm.xlu0 %840, %v447
    %v842 = vpop.permute.xlu0 %841
    %844 = vset.pattern.permute.xlu0 2
    %845 = vperm.xlu0 %844, %v448
    %v846 = vpop.permute.xlu0 %845
    %848 = vset.pattern.permute.xlu0 2
    %849 = vperm.xlu0 %848, %v449
    %v850 = vpop.permute.xlu0 %849
    %852 = vset.pattern.permute.xlu0 2
    %853 = vperm.xlu0 %852, %v450
    %v854 = vpop.permute.xlu0 %853
    %856 = vset.pattern.permute.xlu0 2
    %857 = vperm.xlu0 %856, %v451
    %v858 = vpop.permute.xlu0 %857
    %v860 = vmul.f32 %v830, %v785
    %v861 = vmul.f32 %v834, %v791
    %v862 = vmul.f32 %v838, %v797
    %v863 = vmul.f32 %v842, %v803
    %v864 = vmul.f32 %v846, %v809
    %v865 = vmul.f32 %v850, %v815
    %v866 = vmul.f32 %v854, %v821
    %v867 = vmul.f32 %v858, %v827
    %v868 = vadd.f32 %v732, %v860
    %v869 = vadd.f32 %v733, %v861
    %v870 = vadd.f32 %v734, %v862
    %v871 = vadd.f32 %v735, %v863
    %v872 = vadd.f32 %v736, %v864
    %v873 = vadd.f32 %v737, %v865
    %v874 = vadd.f32 %v738, %v866
    %v875 = vadd.f32 %v739, %v867
    %876 = vset.pattern.permute.xlu0 3
    %877 = vperm.xlu0 %876, %v388
    %v878 = vpop.permute.xlu0 %877
    %880 = vset.pattern.permute.xlu0 3
    %881 = vperm.xlu0 %880, %v389
    %v882 = vpop.permute.xlu0 %881
    %884 = vset.pattern.permute.xlu0 3
    %885 = vperm.xlu0 %884, %v390
    %v886 = vpop.permute.xlu0 %885
    %888 = vset.pattern.permute.xlu0 3
    %889 = vperm.xlu0 %888, %v391
    %v890 = vpop.permute.xlu0 %889
    %892 = vset.pattern.permute.xlu0 3
    %893 = vperm.xlu0 %892, %v392
    %v894 = vpop.permute.xlu0 %893
    %896 = vset.pattern.permute.xlu0 3
    %897 = vperm.xlu0 %896, %v393
    %v898 = vpop.permute.xlu0 %897
    %900 = vset.pattern.permute.xlu0 3
    %901 = vperm.xlu0 %900, %v394
    %v902 = vpop.permute.xlu0 %901
    %904 = vset.pattern.permute.xlu0 3
    %905 = vperm.xlu0 %904, %v395
    %v906 = vpop.permute.xlu0 %905
    %v908 = vmul.f32 %v878, %v55
    %v909 = vmul.f32 %v882, %v56
    %v910 = vmul.f32 %v886, %v57
    %v911 = vmul.f32 %v890, %v58
    %v912 = vmul.f32 %v894, %v59
    %v913 = vmul.f32 %v898, %v60
    %v914 = vmul.f32 %v902, %v61
    %v915 = vmul.f32 %v906, %v62
    %v916 = vrot.slane %v908, 4
    %v917 = vadd.f32 %v908, %v916
    %v918 = vrot.slane %v917, 2
    %v919 = vadd.f32 %v917, %v918
    %v920 = vrot.slane %v919, 1
    %v921 = vadd.f32 %v919, %v920
    %v922 = vrot.slane %v909, 4
    %v923 = vadd.f32 %v909, %v922
    %v924 = vrot.slane %v923, 2
    %v925 = vadd.f32 %v923, %v924
    %v926 = vrot.slane %v925, 1
    %v927 = vadd.f32 %v925, %v926
    %v928 = vrot.slane %v910, 4
    %v929 = vadd.f32 %v910, %v928
    %v930 = vrot.slane %v929, 2
    %v931 = vadd.f32 %v929, %v930
    %v932 = vrot.slane %v931, 1
    %v933 = vadd.f32 %v931, %v932
    %v934 = vrot.slane %v911, 4
    %v935 = vadd.f32 %v911, %v934
    %v936 = vrot.slane %v935, 2
    %v937 = vadd.f32 %v935, %v936
    %v938 = vrot.slane %v937, 1
    %v939 = vadd.f32 %v937, %v938
    %v940 = vrot.slane %v912, 4
    %v941 = vadd.f32 %v912, %v940
    %v942 = vrot.slane %v941, 2
    %v943 = vadd.f32 %v941, %v942
    %v944 = vrot.slane %v943, 1
    %v945 = vadd.f32 %v943, %v944
    %v946 = vrot.slane %v913, 4
    %v947 = vadd.f32 %v913, %v946
    %v948 = vrot.slane %v947, 2
    %v949 = vadd.f32 %v947, %v948
    %v950 = vrot.slane %v949, 1
    %v951 = vadd.f32 %v949, %v950
    %v952 = vrot.slane %v914, 4
    %v953 = vadd.f32 %v914, %v952
    %v954 = vrot.slane %v953, 2
    %v955 = vadd.f32 %v953, %v954
    %v956 = vrot.slane %v955, 1
    %v957 = vadd.f32 %v955, %v956
    %v958 = vrot.slane %v915, 4
    %v959 = vadd.f32 %v915, %v958
    %v960 = vrot.slane %v959, 2
    %v961 = vadd.f32 %v959, %v960
    %v962 = vrot.slane %v961, 1
    %v963 = vadd.f32 %v961, %v962
    %964 = vset.pattern.permute.xlu0 3
    %965 = vperm.xlu0 %964, %v444
    %v966 = vpop.permute.xlu0 %965
    %968 = vset.pattern.permute.xlu0 3
    %969 = vperm.xlu0 %968, %v445
    %v970 = vpop.permute.xlu0 %969
    %972 = vset.pattern.permute.xlu0 3
    %973 = vperm.xlu0 %972, %v446
    %v974 = vpop.permute.xlu0 %973
    %976 = vset.pattern.permute.xlu0 3
    %977 = vperm.xlu0 %976, %v447
    %v978 = vpop.permute.xlu0 %977
    %980 = vset.pattern.permute.xlu0 3
    %981 = vperm.xlu0 %980, %v448
    %v982 = vpop.permute.xlu0 %981
    %984 = vset.pattern.permute.xlu0 3
    %985 = vperm.xlu0 %984, %v449
    %v986 = vpop.permute.xlu0 %985
    %988 = vset.pattern.permute.xlu0 3
    %989 = vperm.xlu0 %988, %v450
    %v990 = vpop.permute.xlu0 %989
    %992 = vset.pattern.permute.xlu0 3
    %993 = vperm.xlu0 %992, %v451
    %v994 = vpop.permute.xlu0 %993
    %v996 = vmul.f32 %v966, %v921
    %v997 = vmul.f32 %v970, %v927
    %v998 = vmul.f32 %v974, %v933
    %v999 = vmul.f32 %v978, %v939
    %v1000 = vmul.f32 %v982, %v945
    %v1001 = vmul.f32 %v986, %v951
    %v1002 = vmul.f32 %v990, %v957
    %v1003 = vmul.f32 %v994, %v963
    %v1004 = vadd.f32 %v868, %v996
    %v1005 = vadd.f32 %v869, %v997
    %v1006 = vadd.f32 %v870, %v998
    %v1007 = vadd.f32 %v871, %v999
    %v1008 = vadd.f32 %v872, %v1000
    %v1009 = vadd.f32 %v873, %v1001
    %v1010 = vadd.f32 %v874, %v1002
    %v1011 = vadd.f32 %v875, %v1003
    %1012 = vset.pattern.permute.xlu0 4
    %1013 = vperm.xlu0 %1012, %v388
    %v1014 = vpop.permute.xlu0 %1013
    %1016 = vset.pattern.permute.xlu0 4
    %1017 = vperm.xlu0 %1016, %v389
    %v1018 = vpop.permute.xlu0 %1017
    %1020 = vset.pattern.permute.xlu0 4
    %1021 = vperm.xlu0 %1020, %v390
    %v1022 = vpop.permute.xlu0 %1021
    %1024 = vset.pattern.permute.xlu0 4
    %1025 = vperm.xlu0 %1024, %v391
    %v1026 = vpop.permute.xlu0 %1025
    %1028 = vset.pattern.permute.xlu0 4
    %1029 = vperm.xlu0 %1028, %v392
    %v1030 = vpop.permute.xlu0 %1029
    %1032 = vset.pattern.permute.xlu0 4
    %1033 = vperm.xlu0 %1032, %v393
    %v1034 = vpop.permute.xlu0 %1033
    %1036 = vset.pattern.permute.xlu0 4
    %1037 = vperm.xlu0 %1036, %v394
    %v1038 = vpop.permute.xlu0 %1037
    %1040 = vset.pattern.permute.xlu0 4
    %1041 = vperm.xlu0 %1040, %v395
    %v1042 = vpop.permute.xlu0 %1041
    %v1044 = vmul.f32 %v1014, %v55
    %v1045 = vmul.f32 %v1018, %v56
    %v1046 = vmul.f32 %v1022, %v57
    %v1047 = vmul.f32 %v1026, %v58
    %v1048 = vmul.f32 %v1030, %v59
    %v1049 = vmul.f32 %v1034, %v60
    %v1050 = vmul.f32 %v1038, %v61
    %v1051 = vmul.f32 %v1042, %v62
    %v1052 = vrot.slane %v1044, 4
    %v1053 = vadd.f32 %v1044, %v1052
    %v1054 = vrot.slane %v1053, 2
    %v1055 = vadd.f32 %v1053, %v1054
    %v1056 = vrot.slane %v1055, 1
    %v1057 = vadd.f32 %v1055, %v1056
    %v1058 = vrot.slane %v1045, 4
    %v1059 = vadd.f32 %v1045, %v1058
    %v1060 = vrot.slane %v1059, 2
    %v1061 = vadd.f32 %v1059, %v1060
    %v1062 = vrot.slane %v1061, 1
    %v1063 = vadd.f32 %v1061, %v1062
    %v1064 = vrot.slane %v1046, 4
    %v1065 = vadd.f32 %v1046, %v1064
    %v1066 = vrot.slane %v1065, 2
    %v1067 = vadd.f32 %v1065, %v1066
    %v1068 = vrot.slane %v1067, 1
    %v1069 = vadd.f32 %v1067, %v1068
    %v1070 = vrot.slane %v1047, 4
    %v1071 = vadd.f32 %v1047, %v1070
    %v1072 = vrot.slane %v1071, 2
    %v1073 = vadd.f32 %v1071, %v1072
    %v1074 = vrot.slane %v1073, 1
    %v1075 = vadd.f32 %v1073, %v1074
    %v1076 = vrot.slane %v1048, 4
    %v1077 = vadd.f32 %v1048, %v1076
    %v1078 = vrot.slane %v1077, 2
    %v1079 = vadd.f32 %v1077, %v1078
    %v1080 = vrot.slane %v1079, 1
    %v1081 = vadd.f32 %v1079, %v1080
    %v1082 = vrot.slane %v1049, 4
    %v1083 = vadd.f32 %v1049, %v1082
    %v1084 = vrot.slane %v1083, 2
    %v1085 = vadd.f32 %v1083, %v1084
    %v1086 = vrot.slane %v1085, 1
    %v1087 = vadd.f32 %v1085, %v1086
    %v1088 = vrot.slane %v1050, 4
    %v1089 = vadd.f32 %v1050, %v1088
    %v1090 = vrot.slane %v1089, 2
    %v1091 = vadd.f32 %v1089, %v1090
    %v1092 = vrot.slane %v1091, 1
    %v1093 = vadd.f32 %v1091, %v1092
    %v1094 = vrot.slane %v1051, 4
    %v1095 = vadd.f32 %v1051, %v1094
    %v1096 = vrot.slane %v1095, 2
    %v1097 = vadd.f32 %v1095, %v1096
    %v1098 = vrot.slane %v1097, 1
    %v1099 = vadd.f32 %v1097, %v1098
    %1100 = vset.pattern.permute.xlu0 4
    %1101 = vperm.xlu0 %1100, %v444
    %v1102 = vpop.permute.xlu0 %1101
    %1104 = vset.pattern.permute.xlu0 4
    %1105 = vperm.xlu0 %1104, %v445
    %v1106 = vpop.permute.xlu0 %1105
    %1108 = vset.pattern.permute.xlu0 4
    %1109 = vperm.xlu0 %1108, %v446
    %v1110 = vpop.permute.xlu0 %1109
    %1112 = vset.pattern.permute.xlu0 4
    %1113 = vperm.xlu0 %1112, %v447
    %v1114 = vpop.permute.xlu0 %1113
    %1116 = vset.pattern.permute.xlu0 4
    %1117 = vperm.xlu0 %1116, %v448
    %v1118 = vpop.permute.xlu0 %1117
    %1120 = vset.pattern.permute.xlu0 4
    %1121 = vperm.xlu0 %1120, %v449
    %v1122 = vpop.permute.xlu0 %1121
    %1124 = vset.pattern.permute.xlu0 4
    %1125 = vperm.xlu0 %1124, %v450
    %v1126 = vpop.permute.xlu0 %1125
    %1128 = vset.pattern.permute.xlu0 4
    %1129 = vperm.xlu0 %1128, %v451
    %v1130 = vpop.permute.xlu0 %1129
    %v1132 = vmul.f32 %v1102, %v1057
    %v1133 = vmul.f32 %v1106, %v1063
    %v1134 = vmul.f32 %v1110, %v1069
    %v1135 = vmul.f32 %v1114, %v1075
    %v1136 = vmul.f32 %v1118, %v1081
    %v1137 = vmul.f32 %v1122, %v1087
    %v1138 = vmul.f32 %v1126, %v1093
    %v1139 = vmul.f32 %v1130, %v1099
    %v1140 = vadd.f32 %v1004, %v1132
    %v1141 = vadd.f32 %v1005, %v1133
    %v1142 = vadd.f32 %v1006, %v1134
    %v1143 = vadd.f32 %v1007, %v1135
    %v1144 = vadd.f32 %v1008, %v1136
    %v1145 = vadd.f32 %v1009, %v1137
    %v1146 = vadd.f32 %v1010, %v1138
    %v1147 = vadd.f32 %v1011, %v1139
    %1148 = vset.pattern.permute.xlu0 5
    %1149 = vperm.xlu0 %1148, %v388
    %v1150 = vpop.permute.xlu0 %1149
    %1152 = vset.pattern.permute.xlu0 5
    %1153 = vperm.xlu0 %1152, %v389
    %v1154 = vpop.permute.xlu0 %1153
    %1156 = vset.pattern.permute.xlu0 5
    %1157 = vperm.xlu0 %1156, %v390
    %v1158 = vpop.permute.xlu0 %1157
    %1160 = vset.pattern.permute.xlu0 5
    %1161 = vperm.xlu0 %1160, %v391
    %v1162 = vpop.permute.xlu0 %1161
    %1164 = vset.pattern.permute.xlu0 5
    %1165 = vperm.xlu0 %1164, %v392
    %v1166 = vpop.permute.xlu0 %1165
    %1168 = vset.pattern.permute.xlu0 5
    %1169 = vperm.xlu0 %1168, %v393
    %v1170 = vpop.permute.xlu0 %1169
    %1172 = vset.pattern.permute.xlu0 5
    %1173 = vperm.xlu0 %1172, %v394
    %v1174 = vpop.permute.xlu0 %1173
    %1176 = vset.pattern.permute.xlu0 5
    %1177 = vperm.xlu0 %1176, %v395
    %v1178 = vpop.permute.xlu0 %1177
    %v1180 = vmul.f32 %v1150, %v55
    %v1181 = vmul.f32 %v1154, %v56
    %v1182 = vmul.f32 %v1158, %v57
    %v1183 = vmul.f32 %v1162, %v58
    %v1184 = vmul.f32 %v1166, %v59
    %v1185 = vmul.f32 %v1170, %v60
    %v1186 = vmul.f32 %v1174, %v61
    %v1187 = vmul.f32 %v1178, %v62
    %v1188 = vrot.slane %v1180, 4
    %v1189 = vadd.f32 %v1180, %v1188
    %v1190 = vrot.slane %v1189, 2
    %v1191 = vadd.f32 %v1189, %v1190
    %v1192 = vrot.slane %v1191, 1
    %v1193 = vadd.f32 %v1191, %v1192
    %v1194 = vrot.slane %v1181, 4
    %v1195 = vadd.f32 %v1181, %v1194
    %v1196 = vrot.slane %v1195, 2
    %v1197 = vadd.f32 %v1195, %v1196
    %v1198 = vrot.slane %v1197, 1
    %v1199 = vadd.f32 %v1197, %v1198
    %v1200 = vrot.slane %v1182, 4
    %v1201 = vadd.f32 %v1182, %v1200
    %v1202 = vrot.slane %v1201, 2
    %v1203 = vadd.f32 %v1201, %v1202
    %v1204 = vrot.slane %v1203, 1
    %v1205 = vadd.f32 %v1203, %v1204
    %v1206 = vrot.slane %v1183, 4
    %v1207 = vadd.f32 %v1183, %v1206
    %v1208 = vrot.slane %v1207, 2
    %v1209 = vadd.f32 %v1207, %v1208
    %v1210 = vrot.slane %v1209, 1
    %v1211 = vadd.f32 %v1209, %v1210
    %v1212 = vrot.slane %v1184, 4
    %v1213 = vadd.f32 %v1184, %v1212
    %v1214 = vrot.slane %v1213, 2
    %v1215 = vadd.f32 %v1213, %v1214
    %v1216 = vrot.slane %v1215, 1
    %v1217 = vadd.f32 %v1215, %v1216
    %v1218 = vrot.slane %v1185, 4
    %v1219 = vadd.f32 %v1185, %v1218
    %v1220 = vrot.slane %v1219, 2
    %v1221 = vadd.f32 %v1219, %v1220
    %v1222 = vrot.slane %v1221, 1
    %v1223 = vadd.f32 %v1221, %v1222
    %v1224 = vrot.slane %v1186, 4
    %v1225 = vadd.f32 %v1186, %v1224
    %v1226 = vrot.slane %v1225, 2
    %v1227 = vadd.f32 %v1225, %v1226
    %v1228 = vrot.slane %v1227, 1
    %v1229 = vadd.f32 %v1227, %v1228
    %v1230 = vrot.slane %v1187, 4
    %v1231 = vadd.f32 %v1187, %v1230
    %v1232 = vrot.slane %v1231, 2
    %v1233 = vadd.f32 %v1231, %v1232
    %v1234 = vrot.slane %v1233, 1
    %v1235 = vadd.f32 %v1233, %v1234
    %1236 = vset.pattern.permute.xlu0 5
    %1237 = vperm.xlu0 %1236, %v444
    %v1238 = vpop.permute.xlu0 %1237
    %1240 = vset.pattern.permute.xlu0 5
    %1241 = vperm.xlu0 %1240, %v445
    %v1242 = vpop.permute.xlu0 %1241
    %1244 = vset.pattern.permute.xlu0 5
    %1245 = vperm.xlu0 %1244, %v446
    %v1246 = vpop.permute.xlu0 %1245
    %1248 = vset.pattern.permute.xlu0 5
    %1249 = vperm.xlu0 %1248, %v447
    %v1250 = vpop.permute.xlu0 %1249
    %1252 = vset.pattern.permute.xlu0 5
    %1253 = vperm.xlu0 %1252, %v448
    %v1254 = vpop.permute.xlu0 %1253
    %1256 = vset.pattern.permute.xlu0 5
    %1257 = vperm.xlu0 %1256, %v449
    %v1258 = vpop.permute.xlu0 %1257
    %1260 = vset.pattern.permute.xlu0 5
    %1261 = vperm.xlu0 %1260, %v450
    %v1262 = vpop.permute.xlu0 %1261
    %1264 = vset.pattern.permute.xlu0 5
    %1265 = vperm.xlu0 %1264, %v451
    %v1266 = vpop.permute.xlu0 %1265
    %v1268 = vmul.f32 %v1238, %v1193
    %v1269 = vmul.f32 %v1242, %v1199
    %v1270 = vmul.f32 %v1246, %v1205
    %v1271 = vmul.f32 %v1250, %v1211
    %v1272 = vmul.f32 %v1254, %v1217
    %v1273 = vmul.f32 %v1258, %v1223
    %v1274 = vmul.f32 %v1262, %v1229
    %v1275 = vmul.f32 %v1266, %v1235
    %v1276 = vadd.f32 %v1140, %v1268
    %v1277 = vadd.f32 %v1141, %v1269
    %v1278 = vadd.f32 %v1142, %v1270
    %v1279 = vadd.f32 %v1143, %v1271
    %v1280 = vadd.f32 %v1144, %v1272
    %v1281 = vadd.f32 %v1145, %v1273
    %v1282 = vadd.f32 %v1146, %v1274
    %v1283 = vadd.f32 %v1147, %v1275
    %1284 = vset.pattern.permute.xlu0 6
    %1285 = vperm.xlu0 %1284, %v388
    %v1286 = vpop.permute.xlu0 %1285
    %1288 = vset.pattern.permute.xlu0 6
    %1289 = vperm.xlu0 %1288, %v389
    %v1290 = vpop.permute.xlu0 %1289
    %1292 = vset.pattern.permute.xlu0 6
    %1293 = vperm.xlu0 %1292, %v390
    %v1294 = vpop.permute.xlu0 %1293
    %1296 = vset.pattern.permute.xlu0 6
    %1297 = vperm.xlu0 %1296, %v391
    %v1298 = vpop.permute.xlu0 %1297
    %1300 = vset.pattern.permute.xlu0 6
    %1301 = vperm.xlu0 %1300, %v392
    %v1302 = vpop.permute.xlu0 %1301
    %1304 = vset.pattern.permute.xlu0 6
    %1305 = vperm.xlu0 %1304, %v393
    %v1306 = vpop.permute.xlu0 %1305
    %1308 = vset.pattern.permute.xlu0 6
    %1309 = vperm.xlu0 %1308, %v394
    %v1310 = vpop.permute.xlu0 %1309
    %1312 = vset.pattern.permute.xlu0 6
    %1313 = vperm.xlu0 %1312, %v395
    %v1314 = vpop.permute.xlu0 %1313
    %v1316 = vmul.f32 %v1286, %v55
    %v1317 = vmul.f32 %v1290, %v56
    %v1318 = vmul.f32 %v1294, %v57
    %v1319 = vmul.f32 %v1298, %v58
    %v1320 = vmul.f32 %v1302, %v59
    %v1321 = vmul.f32 %v1306, %v60
    %v1322 = vmul.f32 %v1310, %v61
    %v1323 = vmul.f32 %v1314, %v62
    %v1324 = vrot.slane %v1316, 4
    %v1325 = vadd.f32 %v1316, %v1324
    %v1326 = vrot.slane %v1325, 2
    %v1327 = vadd.f32 %v1325, %v1326
    %v1328 = vrot.slane %v1327, 1
    %v1329 = vadd.f32 %v1327, %v1328
    %v1330 = vrot.slane %v1317, 4
    %v1331 = vadd.f32 %v1317, %v1330
    %v1332 = vrot.slane %v1331, 2
    %v1333 = vadd.f32 %v1331, %v1332
    %v1334 = vrot.slane %v1333, 1
    %v1335 = vadd.f32 %v1333, %v1334
    %v1336 = vrot.slane %v1318, 4
    %v1337 = vadd.f32 %v1318, %v1336
    %v1338 = vrot.slane %v1337, 2
    %v1339 = vadd.f32 %v1337, %v1338
    %v1340 = vrot.slane %v1339, 1
    %v1341 = vadd.f32 %v1339, %v1340
    %v1342 = vrot.slane %v1319, 4
    %v1343 = vadd.f32 %v1319, %v1342
    %v1344 = vrot.slane %v1343, 2
    %v1345 = vadd.f32 %v1343, %v1344
    %v1346 = vrot.slane %v1345, 1
    %v1347 = vadd.f32 %v1345, %v1346
    %v1348 = vrot.slane %v1320, 4
    %v1349 = vadd.f32 %v1320, %v1348
    %v1350 = vrot.slane %v1349, 2
    %v1351 = vadd.f32 %v1349, %v1350
    %v1352 = vrot.slane %v1351, 1
    %v1353 = vadd.f32 %v1351, %v1352
    %v1354 = vrot.slane %v1321, 4
    %v1355 = vadd.f32 %v1321, %v1354
    %v1356 = vrot.slane %v1355, 2
    %v1357 = vadd.f32 %v1355, %v1356
    %v1358 = vrot.slane %v1357, 1
    %v1359 = vadd.f32 %v1357, %v1358
    %v1360 = vrot.slane %v1322, 4
    %v1361 = vadd.f32 %v1322, %v1360
    %v1362 = vrot.slane %v1361, 2
    %v1363 = vadd.f32 %v1361, %v1362
    %v1364 = vrot.slane %v1363, 1
    %v1365 = vadd.f32 %v1363, %v1364
    %v1366 = vrot.slane %v1323, 4
    %v1367 = vadd.f32 %v1323, %v1366
    %v1368 = vrot.slane %v1367, 2
    %v1369 = vadd.f32 %v1367, %v1368
    %v1370 = vrot.slane %v1369, 1
    %v1371 = vadd.f32 %v1369, %v1370
    %1372 = vset.pattern.permute.xlu0 6
    %1373 = vperm.xlu0 %1372, %v444
    %v1374 = vpop.permute.xlu0 %1373
    %1376 = vset.pattern.permute.xlu0 6
    %1377 = vperm.xlu0 %1376, %v445
    %v1378 = vpop.permute.xlu0 %1377
    %1380 = vset.pattern.permute.xlu0 6
    %1381 = vperm.xlu0 %1380, %v446
    %v1382 = vpop.permute.xlu0 %1381
    %1384 = vset.pattern.permute.xlu0 6
    %1385 = vperm.xlu0 %1384, %v447
    %v1386 = vpop.permute.xlu0 %1385
    %1388 = vset.pattern.permute.xlu0 6
    %1389 = vperm.xlu0 %1388, %v448
    %v1390 = vpop.permute.xlu0 %1389
    %1392 = vset.pattern.permute.xlu0 6
    %1393 = vperm.xlu0 %1392, %v449
    %v1394 = vpop.permute.xlu0 %1393
    %1396 = vset.pattern.permute.xlu0 6
    %1397 = vperm.xlu0 %1396, %v450
    %v1398 = vpop.permute.xlu0 %1397
    %1400 = vset.pattern.permute.xlu0 6
    %1401 = vperm.xlu0 %1400, %v451
    %v1402 = vpop.permute.xlu0 %1401
    %v1404 = vmul.f32 %v1374, %v1329
    %v1405 = vmul.f32 %v1378, %v1335
    %v1406 = vmul.f32 %v1382, %v1341
    %v1407 = vmul.f32 %v1386, %v1347
    %v1408 = vmul.f32 %v1390, %v1353
    %v1409 = vmul.f32 %v1394, %v1359
    %v1410 = vmul.f32 %v1398, %v1365
    %v1411 = vmul.f32 %v1402, %v1371
    %v1412 = vadd.f32 %v1276, %v1404
    %v1413 = vadd.f32 %v1277, %v1405
    %v1414 = vadd.f32 %v1278, %v1406
    %v1415 = vadd.f32 %v1279, %v1407
    %v1416 = vadd.f32 %v1280, %v1408
    %v1417 = vadd.f32 %v1281, %v1409
    %v1418 = vadd.f32 %v1282, %v1410
    %v1419 = vadd.f32 %v1283, %v1411
    %1420 = vset.pattern.permute.xlu0 7
    %1421 = vperm.xlu0 %1420, %v388
    %v1422 = vpop.permute.xlu0 %1421
    %1424 = vset.pattern.permute.xlu0 7
    %1425 = vperm.xlu0 %1424, %v389
    %v1426 = vpop.permute.xlu0 %1425
    %1428 = vset.pattern.permute.xlu0 7
    %1429 = vperm.xlu0 %1428, %v390
    %v1430 = vpop.permute.xlu0 %1429
    %1432 = vset.pattern.permute.xlu0 7
    %1433 = vperm.xlu0 %1432, %v391
    %v1434 = vpop.permute.xlu0 %1433
    %1436 = vset.pattern.permute.xlu0 7
    %1437 = vperm.xlu0 %1436, %v392
    %v1438 = vpop.permute.xlu0 %1437
    %1440 = vset.pattern.permute.xlu0 7
    %1441 = vperm.xlu0 %1440, %v393
    %v1442 = vpop.permute.xlu0 %1441
    %1444 = vset.pattern.permute.xlu0 7
    %1445 = vperm.xlu0 %1444, %v394
    %v1446 = vpop.permute.xlu0 %1445
    %1448 = vset.pattern.permute.xlu0 7
    %1449 = vperm.xlu0 %1448, %v395
    %v1450 = vpop.permute.xlu0 %1449
    %v1452 = vmul.f32 %v1422, %v55
    %v1453 = vmul.f32 %v1426, %v56
    %v1454 = vmul.f32 %v1430, %v57
    %v1455 = vmul.f32 %v1434, %v58
    %v1456 = vmul.f32 %v1438, %v59
    %v1457 = vmul.f32 %v1442, %v60
    %v1458 = vmul.f32 %v1446, %v61
    %v1459 = vmul.f32 %v1450, %v62
    %v1460 = vrot.slane %v1452, 4
    %v1461 = vadd.f32 %v1452, %v1460
    %v1462 = vrot.slane %v1461, 2
    %v1463 = vadd.f32 %v1461, %v1462
    %v1464 = vrot.slane %v1463, 1
    %v1465 = vadd.f32 %v1463, %v1464
    %v1466 = vrot.slane %v1453, 4
    %v1467 = vadd.f32 %v1453, %v1466
    %v1468 = vrot.slane %v1467, 2
    %v1469 = vadd.f32 %v1467, %v1468
    %v1470 = vrot.slane %v1469, 1
    %v1471 = vadd.f32 %v1469, %v1470
    %v1472 = vrot.slane %v1454, 4
    %v1473 = vadd.f32 %v1454, %v1472
    %v1474 = vrot.slane %v1473, 2
    %v1475 = vadd.f32 %v1473, %v1474
    %v1476 = vrot.slane %v1475, 1
    %v1477 = vadd.f32 %v1475, %v1476
    %v1478 = vrot.slane %v1455, 4
    %v1479 = vadd.f32 %v1455, %v1478
    %v1480 = vrot.slane %v1479, 2
    %v1481 = vadd.f32 %v1479, %v1480
    %v1482 = vrot.slane %v1481, 1
    %v1483 = vadd.f32 %v1481, %v1482
    %v1484 = vrot.slane %v1456, 4
    %v1485 = vadd.f32 %v1456, %v1484
    %v1486 = vrot.slane %v1485, 2
    %v1487 = vadd.f32 %v1485, %v1486
    %v1488 = vrot.slane %v1487, 1
    %v1489 = vadd.f32 %v1487, %v1488
    %v1490 = vrot.slane %v1457, 4
    %v1491 = vadd.f32 %v1457, %v1490
    %v1492 = vrot.slane %v1491, 2
    %v1493 = vadd.f32 %v1491, %v1492
    %v1494 = vrot.slane %v1493, 1
    %v1495 = vadd.f32 %v1493, %v1494
    %v1496 = vrot.slane %v1458, 4
    %v1497 = vadd.f32 %v1458, %v1496
    %v1498 = vrot.slane %v1497, 2
    %v1499 = vadd.f32 %v1497, %v1498
    %v1500 = vrot.slane %v1499, 1
    %v1501 = vadd.f32 %v1499, %v1500
    %v1502 = vrot.slane %v1459, 4
    %v1503 = vadd.f32 %v1459, %v1502
    %v1504 = vrot.slane %v1503, 2
    %v1505 = vadd.f32 %v1503, %v1504
    %v1506 = vrot.slane %v1505, 1
    %v1507 = vadd.f32 %v1505, %v1506
    %1508 = vset.pattern.permute.xlu0 7
    %1509 = vperm.xlu0 %1508, %v444
    %v1510 = vpop.permute.xlu0 %1509
    %1512 = vset.pattern.permute.xlu0 7
    %1513 = vperm.xlu0 %1512, %v445
    %v1514 = vpop.permute.xlu0 %1513
    %1516 = vset.pattern.permute.xlu0 7
    %1517 = vperm.xlu0 %1516, %v446
    %v1518 = vpop.permute.xlu0 %1517
    %1520 = vset.pattern.permute.xlu0 7
    %1521 = vperm.xlu0 %1520, %v447
    %v1522 = vpop.permute.xlu0 %1521
    %1524 = vset.pattern.permute.xlu0 7
    %1525 = vperm.xlu0 %1524, %v448
    %v1526 = vpop.permute.xlu0 %1525
    %1528 = vset.pattern.permute.xlu0 7
    %1529 = vperm.xlu0 %1528, %v449
    %v1530 = vpop.permute.xlu0 %1529
    %1532 = vset.pattern.permute.xlu0 7
    %1533 = vperm.xlu0 %1532, %v450
    %v1534 = vpop.permute.xlu0 %1533
    %1536 = vset.pattern.permute.xlu0 7
    %1537 = vperm.xlu0 %1536, %v451
    %v1538 = vpop.permute.xlu0 %1537
    %v1540 = vmul.f32 %v1510, %v1465
    %v1541 = vmul.f32 %v1514, %v1471
    %v1542 = vmul.f32 %v1518, %v1477
    %v1543 = vmul.f32 %v1522, %v1483
    %v1544 = vmul.f32 %v1526, %v1489
    %v1545 = vmul.f32 %v1530, %v1495
    %v1546 = vmul.f32 %v1534, %v1501
    %v1547 = vmul.f32 %v1538, %v1507
    %v1548 = vadd.f32 %v1412, %v1540
    %v1549 = vadd.f32 %v1413, %v1541
    %v1550 = vadd.f32 %v1414, %v1542
    %v1551 = vadd.f32 %v1415, %v1543
    %v1552 = vadd.f32 %v1416, %v1544
    %v1553 = vadd.f32 %v1417, %v1545
    %v1554 = vadd.f32 %v1418, %v1546
    %v1555 = vadd.f32 %v1419, %v1547
    %1556 = vst [vmem:[#allocation7] sm:$0xff] %v1548
    %1557 = vst [vmem:[#allocation7 + $0x8] sm:$0xff] %v1549
    %1558 = vst [vmem:[#allocation7 + $0x10] sm:$0xff] %v1550
    %1559 = vst [vmem:[#allocation7 + $0x18] sm:$0xff] %v1551
    %1560 = vst [vmem:[#allocation7 + $0x20] sm:$0xff] %v1552
    %1561 = vst [vmem:[#allocation7 + $0x28] sm:$0xff] %v1553
    %1562 = vst [vmem:[#allocation7 + $0x30] sm:$0xff] %v1554
    %1563 = vst [vmem:[#allocation7 + $0x38] sm:$0xff] %v1555
    // Predicated region
    $region22: #{tpu_custom_call.1} parent=1 // pred_check
      _
    $region23: #{tpu_custom_call.1} parent=1 // pred_check_branch
      %1565 = sbr.rel (0) target = $region25
    $region24: #{tpu_custom_call.1} parent=1 // pred_region
      %1567 = vsyncadd [#allocation4], 0
      %s1568 = sshll.u32 [#allocation7], 4
      %s1569 = int_to_ptr.vmem [resolvable:$true] %s1568
      %s1570 = sshll.u32 %s3, 4
      %s1571 = int_to_ptr.hbm [resolvable:$true] %s1570
      %1576 = dma.vmem_to_hbm [thread:$0]  %s1569, 1024, %s1571, [#allocation4], 128, 128, 8
    $region25: #{tpu_custom_call.1} parent=1 // pred_fallthru
      _
    // Predicated region
    $region26: #{tpu_custom_call.1} parent=1 // pred_check
      _
    $region27: #{tpu_custom_call.1} parent=1 // pred_check_branch
      %1578 = sbr.rel (0) target = $region29
    $region28: #{tpu_custom_call.1} parent=1 // pred_region
      %1580 = dma.done [#allocation4], 1024
    $region29: #{tpu_custom_call.1} parent=1 // pred_fallthru
      _
    %1581 = vsyncpa [#allocation3], 1
    %1582 = vsyncpa [#allocation6], 1
    %1583 = vsyncpa [#allocation4], 1

</llo_original>
